<compile_context>
chip_gen: v5e
topology: v5e:2x2
jax: 0.10.0
libtpu: 0.0.40
codegen_flags: <defaults>
</compile_context>

<pallas_src>
import functools

import jax
import jax.numpy as jnp
from jax.experimental import pallas as pl
from jax.experimental.pallas import tpu as pltpu

FCS1_UNITS = 600
FCS2_UNITS = 300
FCA1_UNITS = 300
BN_EPS = 1e-5

# Lane-aligned (multiple-of-128) padded widths.
FCS1_PAD = 640
FCS2_PAD = 384
OUT_PAD = 128          # lane-dense final-layer width for the tiled path


# --------------------------------------------------------------------------
# Small-batch (inference-style) path: one monolithic kernel, no grid.
# --------------------------------------------------------------------------
def _critic_kernel_small(state_ref, action_ref, w1_ref, gb_ref, w2_ref, wa_ref,
                         b2wf_ref, bf_ref, out_ref):
    # fcs1 (b1 dropped: exactly cancelled by train-mode BN mean subtraction)
    h1 = jnp.dot(state_ref[...].astype(jnp.bfloat16), w1_ref[...],
                 preferred_element_type=jnp.float32)              # [B, 640] f32

    # BatchNorm1d (training mode). Two-pass centered variance (robust when
    # features are not zero-mean); the centered h1 is reused so normalization
    # is a single fused multiply-add + ReLU over the block.
    gb = gb_ref[...]                                              # [2,640] row0=gamma,row1=beta
    mean = jnp.mean(h1, axis=0, keepdims=True)
    hc = h1 - mean
    var = jnp.mean(hc * hc, axis=0, keepdims=True)
    scale = jax.lax.rsqrt(var + BN_EPS) * gb[0:1, :]
    xs = jnp.maximum(hc * scale + gb[1:2, :], 0.0)                # [B, 640]

    # fcs2 + fca1: two MXU dots into one pre-activation, single fused bias (b2+ba)
    b2wf = b2wf_ref[...]                                          # [2,384] row0=b2+ba,row1=wf
    pre = (jnp.dot(xs.astype(jnp.bfloat16), w2_ref[...],
                   preferred_element_type=jnp.float32)
           + jnp.dot(action_ref[...].astype(jnp.bfloat16), wa_ref[...],
                     preferred_element_type=jnp.float32)
           + b2wf[0:1, :])
    x = jnp.maximum(pre, 0.0)                                     # [B, 384]

    # fc1: 384 -> 1 via VPU multiply + lane reduction (no degenerate N=1 MXU op);
    # bias scalar comes from SMEM.
    out_ref[...] = jnp.sum(x * b2wf[1:2, :], axis=-1, keepdims=True) + bf_ref[0, 0]


@jax.jit
def critic_forward_small(state, action, params):
    B = state.shape[0]
    assert B >= 2, "train-mode BatchNorm requires batch >= 2"
    vmem = pl.BlockSpec(memory_space=pltpu.MemorySpace.VMEM)
    smem = pl.BlockSpec(memory_space=pltpu.MemorySpace.SMEM)
    args = (state, action, params["w1_t"], params["gb"], params["w2_t"],
            params["wa_t"], params["b2wf"], params["bf2d"])
    return pl.pallas_call(
        _critic_kernel_small,
        out_shape=jax.ShapeDtypeStruct((B, 1), jnp.float32),
        in_specs=[vmem] * 7 + [smem],
        out_specs=vmem,
    )(*args)


# --------------------------------------------------------------------------
# Large-batch (training / replay-batch) path: batch grid, two-pass BN.
#   Pass 1: per-column sum / sum^2 of h1, accumulated across batch tiles.
#   Pass 2: normalize + fcs2 + fca1 + fc1 per tile, fully parallel over tiles.
# Weight BlockSpecs use constant index_maps -> weights fetched once, resident.
# --------------------------------------------------------------------------
def _bn_stats_kernel(state_ref, w1_ref, sum_ref, sumsq_ref):
    @pl.when(pl.program_id(0) == 0)
    def _():
        sum_ref[...] = jnp.zeros_like(sum_ref)
        sumsq_ref[...] = jnp.zeros_like(sumsq_ref)

    h1 = jnp.dot(state_ref[...].astype(jnp.bfloat16), w1_ref[...],
                 preferred_element_type=jnp.float32)              # [TB, 640]
    sum_ref[...] += jnp.sum(h1, axis=0, keepdims=True)
    sumsq_ref[...] += jnp.sum(h1 * h1, axis=0, keepdims=True)


def _critic_apply_kernel(state_ref, action_ref, ss_ref, w1_ref, w2_ref, wa_ref,
                         b2a_ref, wfm_ref, out_ref):
    # Recompute h1 for this tile (cheap: state_size is tiny) instead of paying
    # an HBM round-trip for a [B, 640] f32 intermediate.
    h1 = jnp.dot(state_ref[...].astype(jnp.bfloat16), w1_ref[...],
                 preferred_element_type=jnp.float32)              # [TB, 640]
    ss = ss_ref[...]                                              # [2,640] row0=scale,row1=shift
    xs = jnp.maximum(h1 * ss[0:1, :] + ss[1:2, :], 0.0)           # fused BN + ReLU

    pre = (jnp.dot(xs.astype(jnp.bfloat16), w2_ref[...],
                   preferred_element_type=jnp.float32)
           + jnp.dot(action_ref[...].astype(jnp.bfloat16), wa_ref[...],
                     preferred_element_type=jnp.float32)
           + b2a_ref[...])
    x = jnp.maximum(pre, 0.0)                                     # [TB, 384]

    # fc1 as a lane-dense MXU dot: wf lives in column 0 of a [384,128] weight,
    # so stores are full-lane (no masked vst); column 0 is sliced outside.
    out_ref[...] = jnp.dot(x.astype(jnp.bfloat16), wfm_ref[...],
                           preferred_element_type=jnp.float32)    # [TB, 128]


@functools.partial(jax.jit, static_argnames=("batch_tile",))
def critic_forward_tiled(state, action, params, *, batch_tile=256):
    B, S = state.shape
    A = action.shape[1]
    assert B >= 2, "train-mode BatchNorm requires batch >= 2"
    assert B % batch_tile == 0, "batch must be a multiple of batch_tile"
    n_tiles = B // batch_tile
    # Keep batch_tile <= ~1-2K rows on v7x (64 MiB VMEM); v6e/v5e can go larger.

    # ---- Pass 1: BN statistics over the whole batch ----
    sums, sumsqs = pl.pallas_call(
        _bn_stats_kernel,
        out_shape=(jax.ShapeDtypeStruct((1, FCS1_PAD), jnp.float32),
                   jax.ShapeDtypeStruct((1, FCS1_PAD), jnp.float32)),
        grid_spec=pltpu.PrefetchScalarGridSpec(
            num_scalar_prefetch=0,
            grid=(n_tiles,),
            in_specs=[pl.BlockSpec((batch_tile, S), lambda i: (i, 0)),
                      pl.BlockSpec((S, FCS1_PAD), lambda i: (0, 0))],
            out_specs=[pl.BlockSpec((1, FCS1_PAD), lambda i: (0, 0)),
                       pl.BlockSpec((1, FCS1_PAD), lambda i: (0, 0))]),
        compiler_params=pltpu.CompilerParams(
            dimension_semantics=("arbitrary",)),
    )(state, params["w1_t"])

    # Tiny [1,640] BN-parameter math in plain XLA (scale/shift per column).
    gb = params["gb"]
    mean = sums / B
    var = jnp.maximum(sumsqs / B - mean * mean, 0.0)   # biased variance
    scale = gb[0:1, :] * jax.lax.rsqrt(var + BN_EPS)
    shift = gb[1:2, :] - mean * scale
    ss = jnp.concatenate([scale, shift], axis=0)       # [2, 640]

    # ---- Pass 2: normalize + fcs2/fca1 + fc1 per batch tile ----
    out = pl.pallas_call(
        _critic_apply_kernel,
        out_shape=jax.ShapeDtypeStruct((B, OUT_PAD), jnp.float32),
        grid_spec=pltpu.PrefetchScalarGridSpec(
            num_scalar_prefetch=0,
            grid=(n_tiles,),
            in_specs=[pl.BlockSpec((batch_tile, S), lambda i: (i, 0)),
                      pl.BlockSpec((batch_tile, A), lambda i: (i, 0)),
                      pl.BlockSpec((2, FCS1_PAD), lambda i: (0, 0)),
                      pl.BlockSpec((S, FCS1_PAD), lambda i: (0, 0)),
                      pl.BlockSpec((FCS1_PAD, FCS2_PAD), lambda i: (0, 0)),
                      pl.BlockSpec((A, FCS2_PAD), lambda i: (0, 0)),
                      pl.BlockSpec((1, FCS2_PAD), lambda i: (0, 0)),
                      pl.BlockSpec((FCS2_PAD, OUT_PAD), lambda i: (0, 0))],
            out_specs=pl.BlockSpec((batch_tile, OUT_PAD), lambda i: (i, 0))),
        compiler_params=pltpu.CompilerParams(
            dimension_semantics=("parallel",)),
    )(state, action, ss, params["w1_t"], params["w2_t"], params["wa_t"],
      params["b2a"], params["wf_mat"])

    return out[:, 0:1] + params["bf"]


# --------------------------------------------------------------------------
# Parameter construction (mirrors PyTorch nn.Linear defaults + reset_parameters)
# --------------------------------------------------------------------------
def _pad2(x, rows, cols):
    return jnp.pad(x, ((0, rows - x.shape[0]), (0, cols - x.shape[1])))


def init_params(key, state_size, action_size):
    """Returns (kernel_params, reference_params)."""
    ks = jax.random.split(key, 8)

    def uniform(k, shape, bound):
        return jax.random.uniform(k, shape, jnp.float32, -bound, bound)

    # fcs1: default init U(-1/sqrt(in), 1/sqrt(in))
    b_s = 1.0 / jnp.sqrt(float(state_size))
    w1 = uniform(ks[0], (FCS1_UNITS, state_size), b_s)
    b1 = uniform(ks[1], (FCS1_UNITS,), b_s)      # cancelled by train-mode BN; reference only

    # fcs2: weight overridden to U(-0.0015, 0.0015); bias keeps default.
    b_1 = 1.0 / jnp.sqrt(float(FCS1_UNITS))
    w2 = uniform(ks[2], (FCS2_UNITS, FCS1_UNITS), 0.0015)
    b2 = uniform(ks[3], (FCS2_UNITS,), b_1)

    # fca1: default init U(-1/sqrt(action_size))
    b_a = 1.0 / jnp.sqrt(float(action_size))
    wa = uniform(ks[4], (FCA1_UNITS, action_size), b_a)
    ba = uniform(ks[5], (FCA1_UNITS,), b_a)

    # fc1: weight overridden to U(-0.003, 0.003); bias keeps default.
    b_2 = 1.0 / jnp.sqrt(float(FCS2_UNITS))
    wf = uniform(ks[6], (1, FCS2_UNITS), 0.003)
    bf = uniform(ks[7], (1,), b_2)

    # BatchNorm1d defaults: gamma=1, beta=0.
    gamma = jnp.ones((FCS1_UNITS,), jnp.float32)
    beta = jnp.zeros((FCS1_UNITS,), jnp.float32)

    reference_params = {
        "w1": w1, "b1": b1, "gamma": gamma, "beta": beta,
        "w2": w2, "b2": b2, "wa": wa, "ba": ba, "wf": wf, "bf": bf,
    }

    # Kernel layout: weights pre-transposed to [in, out], zero-padded to lane
    # multiples, matmul weights in bf16.  gamma/beta padded with ZEROS so padded
    # BN features come out exactly 0; padded weight rows/cols are 0.
    b2a = _pad2((b2 + ba)[None, :], 1, FCS2_PAD)                  # fused bias [1,384]
    wf_row = _pad2(wf, 1, FCS2_PAD)                               # [1,384] f32
    wf_mat = jnp.zeros((FCS2_PAD, OUT_PAD), jnp.float32).at[:, 0].set(wf_row[0])

    kernel_params = {
        "w1_t": _pad2(w1.T, state_size, FCS1_PAD).astype(jnp.bfloat16),
        "gb": jnp.concatenate([_pad2(gamma[None, :], 1, FCS1_PAD),
                               _pad2(beta[None, :], 1, FCS1_PAD)], axis=0),
        "w2_t": _pad2(w2.T, FCS1_PAD, FCS2_PAD).astype(jnp.bfloat16),
        "wa_t": _pad2(wa.T, action_size, FCS2_PAD).astype(jnp.bfloat16),
        # small path:
        "b2wf": jnp.concatenate([b2a, wf_row], axis=0),           # [2,384] f32
        "bf2d": bf.reshape(1, 1),                                 # SMEM scalar
        # tiled path:
        "b2a": b2a,
        "wf_mat": wf_mat.astype(jnp.bfloat16),                    # [384,128]
        "bf": bf,                                                 # added outside kernel
    }
    return kernel_params, reference_params


def _reference_forward(state, action, p):
    """Pure-JAX f32 reference faithful to the PyTorch module (includes b1)."""
    h1 = state @ p["w1"].T + p["b1"]
    mean = jnp.mean(h1, axis=0, keepdims=True)
    var = jnp.mean((h1 - mean) ** 2, axis=0, keepdims=True)
    h1n = (h1 - mean) / jnp.sqrt(var + BN_EPS) * p["gamma"] + p["beta"]
    xs = jax.nn.relu(h1n)
    xs2 = xs @ p["w2"].T + p["b2"]
    xa = action @ p["wa"].T + p["ba"]
    x = jax.nn.relu(xs2 + xa)
    return x @ p["wf"].T + p["bf"]


if __name__ == "__main__":
    key = jax.random.PRNGKey(0)
    k_param, k_state, k_action = jax.random.split(key, 3)

    state_size, action_size = 32, 8
    kparams, rparams = init_params(k_param, state_size, action_size)

    # --- small-batch path (monolithic kernel) ---
    B_small = 8
    state = jax.random.normal(k_state, (B_small, state_size), jnp.float32)
    action = jax.random.normal(k_action, (B_small, action_size), jnp.float32)
    q = critic_forward_small(state, action, kparams)
    jax.block_until_ready(q)
    q_ref = _reference_forward(state, action, rparams)
    assert q.shape == (B_small, 1)
    err = float(jnp.max(jnp.abs(q - q_ref)))
    # Tolerance covers bf16 weight/activation rounding on the MXU paths.
    assert jnp.allclose(q, q_ref, atol=2e-3, rtol=1e-2), f"small-path mismatch: {err}"

    # --- large-batch path (batch grid, two-pass BN, weights resident) ---
    B_big, TB = 64, 16
    state_b = jax.random.normal(jax.random.fold_in(k_state, 1),
                                (B_big, state_size), jnp.float32)
    action_b = jax.random.normal(jax.random.fold_in(k_action, 1),
                                 (B_big, action_size), jnp.float32)
    q_b = critic_forward_tiled(state_b, action_b, kparams, batch_tile=TB)
    jax.block_until_ready(q_b)
    q_b_ref = _reference_forward(state_b, action_b, rparams)
    assert q_b.shape == (B_big, 1)
    err_b = float(jnp.max(jnp.abs(q_b - q_b_ref)))
    assert jnp.allclose(q_b, q_b_ref, atol=3e-3, rtol=1e-2), f"tiled-path mismatch: {err_b}"

    print("KERNEL_OK")
</pallas_src>

<mosaic_0001>
module attributes {stable_mosaic.version = 11 : i64} {
  func.func @_critic_kernel_small(%arg0: memref<8x32xf32, #tpu.memory_space<vmem>>, %arg1: memref<8x8xf32, #tpu.memory_space<vmem>>, %arg2: memref<32x640xbf16, #tpu.memory_space<vmem>>, %arg3: memref<2x640xf32, #tpu.memory_space<vmem>>, %arg4: memref<640x384xbf16, #tpu.memory_space<vmem>>, %arg5: memref<8x384xbf16, #tpu.memory_space<vmem>>, %arg6: memref<2x384xf32, #tpu.memory_space<vmem>>, %arg7: memref<1x1xf32, #tpu.memory_space<smem>>, %arg8: memref<8x1xf32, #tpu.memory_space<vmem>>) attributes {dimension_semantics = [], scalar_prefetch = 0 : i64, scratch_operands = 0 : i64, tpu.core_type = #tpu.core_type<tc>} {
    %c0 = arith.constant 0 : index
    %c0_0 = arith.constant 0 : index
    %0 = vector.load %arg0[%c0, %c0_0] : memref<8x32xf32, #tpu.memory_space<vmem>>, vector<8x32xf32>
    %1 = arith.truncf %0 : vector<8x32xf32> to vector<8x32xbf16>
    %c0_1 = arith.constant 0 : index
    %c0_2 = arith.constant 0 : index
    %2 = vector.load %arg2[%c0_1, %c0_2] : memref<32x640xbf16, #tpu.memory_space<vmem>>, vector<32x640xbf16>
    %cst = arith.constant dense<0.000000e+00> : vector<8x640xf32>
    %3 = tpu.matmul %1, %2, %cst {dimension_numbers = #tpu.dot_dimension_numbers<[1], [0], [0], [1], [0, 0, 1, 1], [], []>} : vector<8x32xbf16>, vector<32x640xbf16>, vector<8x640xf32> -> vector<8x640xf32>
    %c0_3 = arith.constant 0 : index
    %c0_4 = arith.constant 0 : index
    %4 = vector.load %arg3[%c0_3, %c0_4] : memref<2x640xf32, #tpu.memory_space<vmem>>, vector<2x640xf32>
    %cst_5 = arith.constant dense<0.000000e+00> : vector<640xf32>
    %5 = vector.multi_reduction <add>, %3, %cst_5 [0] : vector<8x640xf32> to vector<640xf32>
    %6 = vector.shape_cast %5 : vector<640xf32> to vector<1x640xf32>
    %cst_6 = arith.constant 8.000000e+00 : f32
    %7 = vector.broadcast %cst_6 : f32 to vector<1x640xf32>
    %8 = arith.divf %6, %7 : vector<1x640xf32>
    %9 = vector.broadcast %8 : vector<1x640xf32> to vector<8x640xf32>
    %10 = arith.subf %3, %9 : vector<8x640xf32>
    %11 = arith.mulf %10, %10 : vector<8x640xf32>
    %cst_7 = arith.constant dense<0.000000e+00> : vector<640xf32>
    %12 = vector.multi_reduction <add>, %11, %cst_7 [0] : vector<8x640xf32> to vector<640xf32>
    %13 = vector.shape_cast %12 : vector<640xf32> to vector<1x640xf32>
    %cst_8 = arith.constant 8.000000e+00 : f32
    %14 = vector.broadcast %cst_8 : f32 to vector<1x640xf32>
    %15 = arith.divf %13, %14 : vector<1x640xf32>
    %cst_9 = arith.constant 9.99999974E-6 : f32
    %16 = vector.broadcast %cst_9 : f32 to vector<1x640xf32>
    %17 = arith.addf %15, %16 : vector<1x640xf32>
    %18 = math.rsqrt %17 : vector<1x640xf32>
    %19 = vector.extract_strided_slice %4 {offsets = [0, 0], sizes = [1, 640], strides = [1, 1]} : vector<2x640xf32> to vector<1x640xf32>
    %20 = arith.mulf %18, %19 : vector<1x640xf32>
    %21 = vector.broadcast %20 : vector<1x640xf32> to vector<8x640xf32>
    %22 = arith.mulf %10, %21 : vector<8x640xf32>
    %23 = vector.extract_strided_slice %4 {offsets = [1, 0], sizes = [1, 640], strides = [1, 1]} : vector<2x640xf32> to vector<1x640xf32>
    %24 = vector.broadcast %23 : vector<1x640xf32> to vector<8x640xf32>
    %25 = arith.addf %22, %24 : vector<8x640xf32>
    %cst_10 = arith.constant 0.000000e+00 : f32
    %26 = vector.broadcast %cst_10 : f32 to vector<8x640xf32>
    %27 = arith.maximumf %25, %26 : vector<8x640xf32>
    %c0_11 = arith.constant 0 : index
    %c0_12 = arith.constant 0 : index
    %28 = vector.load %arg6[%c0_11, %c0_12] : memref<2x384xf32, #tpu.memory_space<vmem>>, vector<2x384xf32>
    %29 = arith.truncf %27 : vector<8x640xf32> to vector<8x640xbf16>
    %c0_13 = arith.constant 0 : index
    %c0_14 = arith.constant 0 : index
    %30 = vector.load %arg4[%c0_13, %c0_14] : memref<640x384xbf16, #tpu.memory_space<vmem>>, vector<640x384xbf16>
    %cst_15 = arith.constant dense<0.000000e+00> : vector<8x384xf32>
    %31 = tpu.matmul %29, %30, %cst_15 {dimension_numbers = #tpu.dot_dimension_numbers<[1], [0], [0], [1], [0, 0, 1, 1], [], []>} : vector<8x640xbf16>, vector<640x384xbf16>, vector<8x384xf32> -> vector<8x384xf32>
    %c0_16 = arith.constant 0 : index
    %c0_17 = arith.constant 0 : index
    %32 = vector.load %arg1[%c0_16, %c0_17] : memref<8x8xf32, #tpu.memory_space<vmem>>, vector<8x8xf32>
    %33 = arith.truncf %32 : vector<8x8xf32> to vector<8x8xbf16>
    %c0_18 = arith.constant 0 : index
    %c0_19 = arith.constant 0 : index
    %34 = vector.load %arg5[%c0_18, %c0_19] : memref<8x384xbf16, #tpu.memory_space<vmem>>, vector<8x384xbf16>
    %cst_20 = arith.constant dense<0.000000e+00> : vector<8x384xf32>
    %35 = tpu.matmul %33, %34, %cst_20 {dimension_numbers = #tpu.dot_dimension_numbers<[1], [0], [0], [1], [0, 0, 1, 1], [], []>} : vector<8x8xbf16>, vector<8x384xbf16>, vector<8x384xf32> -> vector<8x384xf32>
    %36 = arith.addf %31, %35 : vector<8x384xf32>
    %37 = vector.extract_strided_slice %28 {offsets = [0, 0], sizes = [1, 384], strides = [1, 1]} : vector<2x384xf32> to vector<1x384xf32>
    %38 = vector.broadcast %37 : vector<1x384xf32> to vector<8x384xf32>
    %39 = arith.addf %36, %38 : vector<8x384xf32>
    %cst_21 = arith.constant 0.000000e+00 : f32
    %40 = vector.broadcast %cst_21 : f32 to vector<8x384xf32>
    %41 = arith.maximumf %39, %40 : vector<8x384xf32>
    %42 = vector.extract_strided_slice %28 {offsets = [1, 0], sizes = [1, 384], strides = [1, 1]} : vector<2x384xf32> to vector<1x384xf32>
    %43 = vector.broadcast %42 : vector<1x384xf32> to vector<8x384xf32>
    %44 = arith.mulf %41, %43 : vector<8x384xf32>
    %cst_22 = arith.constant dense<0.000000e+00> : vector<8xf32>
    %45 = vector.multi_reduction <add>, %44, %cst_22 [1] : vector<8x384xf32> to vector<8xf32>
    %46 = vector.shape_cast %45 : vector<8xf32> to vector<8x1xf32>
    %c0_23 = arith.constant 0 : index
    %c0_24 = arith.constant 0 : index
    %47 = memref.load %arg7[%c0_23, %c0_24] : memref<1x1xf32, #tpu.memory_space<smem>>
    %48 = vector.broadcast %47 : f32 to vector<8x1xf32>
    %49 = arith.addf %46, %48 : vector<8x1xf32>
    %c0_25 = arith.constant 0 : index
    %c0_26 = arith.constant 0 : index
    %50 = vector.load %arg8[%c0_25, %c0_26] : memref<8x1xf32, #tpu.memory_space<vmem>>, vector<8x1xf32>
    tpu.vector_store %arg8[%c0_25, %c0_26], %49 {strides = array<i32>} : memref<8x1xf32, #tpu.memory_space<vmem>>, vector<8x1xf32>,
    return
  }
}

</mosaic_0001>

<llo_original>
// kernel: critic_forward_small.1
$region0: #{critic_forward_small.1}
  #allocation0 [shape = 'u32[]', space=smem, size = 0x4, offset = 0x4, fixed_abs, tag = 'smem constant byte address 0x4 - core index']
  #allocation1 [shape = 'u32[72,128]{1,0:T(1,128)}', space=vmem, size = 0x9000, scoped, tag = 'internal scratch']
  #allocation2 [shape = 'f32[1,1]{1,0:T(1,128)S(6)}', space=smem, size = 0x200, scoped, tag = 'scoped memory for critic_forward_small.1']
  %s0 = inlined_call_operand.hbm [shape: f32[8,32], index: 0, kind: input, shape index: {}]
  %s1 = inlined_call_operand.hbm [shape: f32[8,8], index: 1, kind: input, shape index: {}]
  %s2 = inlined_call_operand.hbm [shape: bf16[32,640], index: 2, kind: input, shape index: {}]
  %s3 = inlined_call_operand.hbm [shape: f32[2,640], index: 3, kind: input, shape index: {}]
  %s4 = inlined_call_operand.hbm [shape: bf16[640,384], index: 4, kind: input, shape index: {}]
  %s5 = inlined_call_operand.hbm [shape: bf16[8,384], index: 5, kind: input, shape index: {}]
  %s6 = inlined_call_operand.hbm [shape: f32[2,384], index: 6, kind: input, shape index: {}]
  %s7 = inlined_call_operand.<no memory space> [shape: f32[1,1], index: 7, kind: input, shape index: {}]
  %s8 = inlined_call_operand.vmem [shape: f32[8,1], index: 8, kind: output, shape index: {}]
  %s9 = sld [smem:[#allocation0]]
  $region70: #{critic_forward_small.1} parent=0
    _
  %s11 = ssub.s32 1, %s9
  %s12 = scalar_select 0, %s11, %s9
  %13 = sst [smem:[#allocation2]] %s7
  $region1: #{critic_forward_small.1} parent=0
    #allocation3 [shape = 'u8[4096]{0}', space=vmem, size = 0x1000, scoped, tag = 'input window, operand 0, single buffered']
    #allocation4 [shape = 's32[1]{0}', space=sflag, size = 0x4, scoped, tag = 'scoped memory for critic_forward_small.1']
    #allocation5 [shape = 'u8[4096]{0}', space=vmem, size = 0x1000, scoped, tag = 'input window, operand 1, single buffered']
    #allocation6 [shape = 's32[1]{0}', space=sflag, size = 0x4, scoped, tag = 'scoped memory for critic_forward_small.1']
    #allocation7 [shape = 'u8[40960]{0}', space=vmem, size = 0xa000, scoped, tag = 'input window, operand 2, single buffered']
    #allocation8 [shape = 'u8[5120]{0}', space=vmem, size = 0x1400, scoped, tag = 'input window, operand 3, single buffered']
    #allocation9 [shape = 's32[1]{0}', space=sflag, size = 0x4, scoped, tag = 'scoped memory for critic_forward_small.1']
    #allocation10 [shape = 'u8[491520]{0}', space=vmem, size = 0x78000, scoped, tag = 'input window, operand 4, single buffered']
    #allocation11 [shape = 'u8[6144]{0}', space=vmem, size = 0x1800, scoped, tag = 'input window, operand 5, single buffered']
    #allocation12 [shape = 's32[1]{0}', space=sflag, size = 0x4, scoped, tag = 'scoped memory for critic_forward_small.1']
    #allocation13 [shape = 'u8[3072]{0}', space=vmem, size = 0xc00, scoped, tag = 'input window, operand 6, single buffered']
    %14 = vsyncpa [#allocation4], 0
    %15 = vsyncpa [#allocation6], 0
    %16 = vsyncpa [#allocation9], 0
    %17 = vsyncpa [#allocation12], 0
    // Predicated region
    $region2: #{critic_forward_small.1} parent=1 // pred_check
      _
    $region3: #{critic_forward_small.1} parent=1 // pred_check_branch
      %19 = sbr.rel (0) target = $region5
    $region4: #{critic_forward_small.1} parent=1 // pred_region
      %21 = vsyncadd [#allocation4], 0
      %s23 = sshll.u32 %s0, 4
      %s24 = int_to_ptr.hbm [resolvable:$true] %s23
      %s25 = sshll.u32 [#allocation3], 4
      %s26 = int_to_ptr.vmem [resolvable:$true] %s25
      %28 = dma.hbm_to_vmem [thread:$0]  %s24, 128, %s26, [#allocation4]
    $region5: #{critic_forward_small.1} parent=1 // pred_fallthru
      _
    // Predicated region
    $region6: #{critic_forward_small.1} parent=1 // pred_check
      _
    $region7: #{critic_forward_small.1} parent=1 // pred_check_branch
      %30 = sbr.rel (0) target = $region9
    $region8: #{critic_forward_small.1} parent=1 // pred_region
      %32 = vsyncadd [#allocation6], 0
      %s34 = sshll.u32 %s1, 4
      %s35 = int_to_ptr.hbm [resolvable:$true] %s34
      %s36 = sshll.u32 [#allocation5], 4
      %s37 = int_to_ptr.vmem [resolvable:$true] %s36
      %39 = dma.hbm_to_vmem [thread:$0]  %s35, 128, %s37, [#allocation6]
    $region9: #{critic_forward_small.1} parent=1 // pred_fallthru
      _
    // Predicated region
    $region10: #{critic_forward_small.1} parent=1 // pred_check
      _
    $region11: #{critic_forward_small.1} parent=1 // pred_check_branch
      %41 = sbr.rel (0) target = $region13
    $region12: #{critic_forward_small.1} parent=1 // pred_region
      %43 = vsyncadd [#allocation6], 0
      %s44 = sshll.u32 %s2, 4
      %s45 = int_to_ptr.hbm [resolvable:$true] %s44
      %s46 = sshll.u32 [#allocation7], 4
      %s47 = int_to_ptr.vmem [resolvable:$true] %s46
      %52 = dma.hbm_to_vmem [thread:$0]  %s45, 1280, %s47, [#allocation6], 320, 320, 20
    $region13: #{critic_forward_small.1} parent=1 // pred_fallthru
      _
    // Predicated region
    $region14: #{critic_forward_small.1} parent=1 // pred_check
      _
    $region15: #{critic_forward_small.1} parent=1 // pred_check_branch
      %54 = sbr.rel (0) target = $region17
    $region16: #{critic_forward_small.1} parent=1 // pred_region
      %56 = vsyncadd [#allocation9], 0
      %s58 = sshll.u32 %s3, 4
      %s59 = int_to_ptr.hbm [resolvable:$true] %s58
      %s60 = sshll.u32 [#allocation8], 4
      %s61 = int_to_ptr.vmem [resolvable:$true] %s60
      %63 = dma.hbm_to_vmem [thread:$0]  %s59, 160, %s61, [#allocation9]
    $region17: #{critic_forward_small.1} parent=1 // pred_fallthru
      _
    // Predicated region
    $region18: #{critic_forward_small.1} parent=1 // pred_check
      _
    $region19: #{critic_forward_small.1} parent=1 // pred_check_branch
      %65 = sbr.rel (0) target = $region21
    $region20: #{critic_forward_small.1} parent=1 // pred_region
      %67 = vsyncadd [#allocation9], 0
      %s68 = sshll.u32 %s4, 4
      %s69 = int_to_ptr.hbm [resolvable:$true] %s68
      %s70 = sshll.u32 [#allocation10], 4
      %s71 = int_to_ptr.vmem [resolvable:$true] %s70
      %76 = dma.hbm_to_vmem [thread:$0]  %s69, 15360, %s71, [#allocation9], 192, 192, 12
    $region21: #{critic_forward_small.1} parent=1 // pred_fallthru
      _
    // Predicated region
    $region22: #{critic_forward_small.1} parent=1 // pred_check
      _
    $region23: #{critic_forward_small.1} parent=1 // pred_check_branch
      %78 = sbr.rel (0) target = $region25
    $region24: #{critic_forward_small.1} parent=1 // pred_region
      %80 = vsyncadd [#allocation12], 0
      %s82 = sshll.u32 %s5, 4
      %s83 = int_to_ptr.hbm [resolvable:$true] %s82
      %s84 = sshll.u32 [#allocation11], 4
      %s85 = int_to_ptr.vmem [resolvable:$true] %s84
      %87 = dma.hbm_to_vmem [thread:$0]  %s83, 192, %s85, [#allocation12]
    $region25: #{critic_forward_small.1} parent=1 // pred_fallthru
      _
    // Predicated region
    $region26: #{critic_forward_small.1} parent=1 // pred_check
      _
    $region27: #{critic_forward_small.1} parent=1 // pred_check_branch
      %89 = sbr.rel (0) target = $region29
    $region28: #{critic_forward_small.1} parent=1 // pred_region
      %91 = vsyncadd [#allocation12], 0
      %s93 = sshll.u32 %s6, 4
      %s94 = int_to_ptr.hbm [resolvable:$true] %s93
      %s95 = sshll.u32 [#allocation13], 4
      %s96 = int_to_ptr.vmem [resolvable:$true] %s95
      %98 = dma.hbm_to_vmem [thread:$0]  %s94, 96, %s96, [#allocation12]
    $region29: #{critic_forward_small.1} parent=1 // pred_fallthru
      _
    // Predicated region
    $region30: #{critic_forward_small.1} parent=1 // pred_check
      _
    $region31: #{critic_forward_small.1} parent=1 // pred_check_branch
      %100 = sbr.rel (0) target = $region33
    $region32: #{critic_forward_small.1} parent=1 // pred_region
      _
    $region33: #{critic_forward_small.1} parent=1 // pred_fallthru
      _
    // Predicated region
    $region34: #{critic_forward_small.1} parent=1 // pred_check
      _
    $region35: #{critic_forward_small.1} parent=1 // pred_check_branch
      %102 = sbr.rel (0) target = $region37
    $region36: #{critic_forward_small.1} parent=1 // pred_region
      %104 = dma.done [#allocation4], 128
    $region37: #{critic_forward_small.1} parent=1 // pred_fallthru
      _
    // Predicated region
    $region38: #{critic_forward_small.1} parent=1 // pred_check
      _
    $region39: #{critic_forward_small.1} parent=1 // pred_check_branch
      %106 = sbr.rel (0) target = $region41
    $region40: #{critic_forward_small.1} parent=1 // pred_region
      %108 = dma.done [#allocation6], 128
    $region41: #{critic_forward_small.1} parent=1 // pred_fallthru
      _
    // Predicated region
    $region42: #{critic_forward_small.1} parent=1 // pred_check
      _
    $region43: #{critic_forward_small.1} parent=1 // pred_check_branch
      %110 = sbr.rel (0) target = $region45
    $region44: #{critic_forward_small.1} parent=1 // pred_region
      %112 = dma.done [#allocation6], 1280
    $region45: #{critic_forward_small.1} parent=1 // pred_fallthru
      _
    // Predicated region
    $region46: #{critic_forward_small.1} parent=1 // pred_check
      _
    $region47: #{critic_forward_small.1} parent=1 // pred_check_branch
      %114 = sbr.rel (0) target = $region49
    $region48: #{critic_forward_small.1} parent=1 // pred_region
      %116 = dma.done [#allocation9], 160
    $region49: #{critic_forward_small.1} parent=1 // pred_fallthru
      _
    // Predicated region
    $region50: #{critic_forward_small.1} parent=1 // pred_check
      _
    $region51: #{critic_forward_small.1} parent=1 // pred_check_branch
      %118 = sbr.rel (0) target = $region53
    $region52: #{critic_forward_small.1} parent=1 // pred_region
      %120 = dma.done [#allocation9], 15360
    $region53: #{critic_forward_small.1} parent=1 // pred_fallthru
      _
    // Predicated region
    $region54: #{critic_forward_small.1} parent=1 // pred_check
      _
    $region55: #{critic_forward_small.1} parent=1 // pred_check_branch
      %122 = sbr.rel (0) target = $region57
    $region56: #{critic_forward_small.1} parent=1 // pred_region
      %124 = dma.done [#allocation12], 192
    $region57: #{critic_forward_small.1} parent=1 // pred_fallthru
      _
    // Predicated region
    $region58: #{critic_forward_small.1} parent=1 // pred_check
      _
    $region59: #{critic_forward_small.1} parent=1 // pred_check_branch
      %126 = sbr.rel (0) target = $region61
    $region60: #{critic_forward_small.1} parent=1 // pred_region
      %128 = dma.done [#allocation12], 96
    $region61: #{critic_forward_small.1} parent=1 // pred_fallthru
      _
    %v130 = vld [vmem:[#allocation3] sm:$0xff]
    %v131 = vpack.c.bf16 %v130, %v130
    %v132 = vld [vmem:[#allocation7] sm:$0xff]
    %v133 = vld [vmem:[#allocation7 + $0x8] sm:$0xff]
    %v134 = vld [vmem:[#allocation7 + $0x10] sm:$0xf]
    %v135 = vld [vmem:[#allocation7 + $0x14] sm:$0xff]
    %v136 = vld [vmem:[#allocation7 + $0x1c] sm:$0xff]
    %v137 = vld [vmem:[#allocation7 + $0x24] sm:$0xf]
    %v138 = vld [vmem:[#allocation7 + $0x28] sm:$0xff]
    %v139 = vld [vmem:[#allocation7 + $0x30] sm:$0xff]
    %v140 = vld [vmem:[#allocation7 + $0x38] sm:$0xf]
    %v141 = vld [vmem:[#allocation7 + $0x3c] sm:$0xff]
    %v142 = vld [vmem:[#allocation7 + $0x44] sm:$0xff]
    %v143 = vld [vmem:[#allocation7 + $0x4c] sm:$0xf]
    %v156 = vunpack.c.l.b16 %v132
    %v157 = vunpack.c.h.b16 %v132
    %v158 = vunpack.c.l.b16 %v133
    %v159 = vunpack.c.h.b16 %v133
    %v160 = vunpack.c.l.b16 %v134
    %v161 = vunpack.c.l.b16 %v135
    %v162 = vunpack.c.h.b16 %v135
    %v163 = vunpack.c.l.b16 %v136
    %v164 = vunpack.c.h.b16 %v136
    %v165 = vunpack.c.l.b16 %v137
    %v166 = vunpack.c.l.b16 %v138
    %v167 = vunpack.c.h.b16 %v138
    %v168 = vunpack.c.l.b16 %v139
    %v169 = vunpack.c.h.b16 %v139
    %v170 = vunpack.c.l.b16 %v140
    %v171 = vunpack.c.l.b16 %v141
    %v172 = vunpack.c.h.b16 %v141
    %v173 = vunpack.c.l.b16 %v142
    %v174 = vunpack.c.h.b16 %v142
    %v175 = vunpack.c.l.b16 %v143
    %v176 = vpack.c.b16 %v161, %v156
    %v177 = vpack.c.b16 %v162, %v157
    %v178 = vpack.c.b16 %v163, %v158
    %v179 = vpack.c.b16 %v164, %v159
    %v180 = vpack.c.b16 %v165, %v160
    %v181 = vpack.c.b16 %v171, %v166
    %v182 = vpack.c.b16 %v172, %v167
    %v183 = vpack.c.b16 %v173, %v168
    %v184 = vpack.c.b16 %v174, %v169
    %v185 = vpack.c.b16 %v175, %v170
    %vm196 = vcmask 261120
    %v198 = vsel %vm196, %v131, 0
    %200 = vmatpush.bf16.msra.mxu0 0
    %201 = vmatpush.bf16.msra.mxu0 0
    %202 = vmatpush.bf16.msra.mxu0 0
    %203 = vmatpush.bf16.msra.mxu0 0
    %204 = vmatpush.bf16.msra.mxu0 0
    %205 = vmatpush.bf16.msra.mxu0 0
    %206 = vmatpush.bf16.msra.mxu0 %v181
    %207 = vmatpush.bf16.msra.mxu0 %v176
    %208 = vmatmul.bf16.gmra.mxu0 %v198
    %v209 = vpop.f32.mrf.mxu0
    %v210 = vadd.f32 0.0, %v209
    %v211 = vpop.f32.mrf.mxu0
    %212 = vdwg.mxu0
    %213 = vmatpush.bf16.msra.mxu0 0
    %214 = vmatpush.bf16.msra.mxu0 0
    %215 = vmatpush.bf16.msra.mxu0 0
    %216 = vmatpush.bf16.msra.mxu0 0
    %217 = vmatpush.bf16.msra.mxu0 0
    %218 = vmatpush.bf16.msra.mxu0 0
    %219 = vmatpush.bf16.msra.mxu0 %v182
    %220 = vmatpush.bf16.msra.mxu0 %v177
    %221 = vmatmul.bf16.gmra.mxu0 %v198
    %v222 = vpop.f32.mrf.mxu0
    %v223 = vadd.f32 0.0, %v222
    %v224 = vpop.f32.mrf.mxu0
    %225 = vdwg.mxu0
    %226 = vmatpush.bf16.msra.mxu0 0
    %227 = vmatpush.bf16.msra.mxu0 0
    %228 = vmatpush.bf16.msra.mxu0 0
    %229 = vmatpush.bf16.msra.mxu0 0
    %230 = vmatpush.bf16.msra.mxu0 0
    %231 = vmatpush.bf16.msra.mxu0 0
    %232 = vmatpush.bf16.msra.mxu0 %v183
    %233 = vmatpush.bf16.msra.mxu0 %v178
    %234 = vmatmul.bf16.gmra.mxu0 %v198
    %v235 = vpop.f32.mrf.mxu0
    %v236 = vadd.f32 0.0, %v235
    %v237 = vpop.f32.mrf.mxu0
    %238 = vdwg.mxu0
    %239 = vmatpush.bf16.msra.mxu0 0
    %240 = vmatpush.bf16.msra.mxu0 0
    %241 = vmatpush.bf16.msra.mxu0 0
    %242 = vmatpush.bf16.msra.mxu0 0
    %243 = vmatpush.bf16.msra.mxu0 0
    %244 = vmatpush.bf16.msra.mxu0 0
    %245 = vmatpush.bf16.msra.mxu0 %v184
    %246 = vmatpush.bf16.msra.mxu0 %v179
    %247 = vmatmul.bf16.gmra.mxu0 %v198
    %v248 = vpop.f32.mrf.mxu0
    %v249 = vadd.f32 0.0, %v248
    %v250 = vpop.f32.mrf.mxu0
    %251 = vdwg.mxu0
    %252 = vmatpush.bf16.msra.mxu0 0
    %253 = vmatpush.bf16.msra.mxu0 0
    %254 = vmatpush.bf16.msra.mxu0 0
    %255 = vmatpush.bf16.msra.mxu0 0
    %256 = vmatpush.bf16.msra.mxu0 0
    %257 = vmatpush.bf16.msra.mxu0 0
    %258 = vmatpush.bf16.msra.mxu0 %v185
    %259 = vmatpush.bf16.msra.mxu0 %v180
    %260 = vmatmul.bf16.gmra.mxu0 %v198
    %v261 = vpop.f32.mrf.mxu0
    %v262 = vadd.f32 0.0, %v261
    %v263 = vpop.f32.mrf.mxu0
    %264 = vdwg.mxu0
    %v265 = vld [vmem:[#allocation8] sm:$0xff]
    %v266 = vld [vmem:[#allocation8 + $0x8] sm:$0x3]
    %v267 = vrot.slane %v210, 4
    %v268 = vadd.f32 %v210, %v267
    %v269 = vrot.slane %v268, 2
    %v270 = vadd.f32 %v268, %v269
    %v271 = vrot.slane %v270, 1
    %v272 = vadd.f32 %v270, %v271
    %v273 = vrot.slane %v223, 4
    %v274 = vadd.f32 %v223, %v273
    %v275 = vrot.slane %v274, 2
    %v276 = vadd.f32 %v274, %v275
    %v277 = vrot.slane %v276, 1
    %v278 = vadd.f32 %v276, %v277
    %v279 = vrot.slane %v236, 4
    %v280 = vadd.f32 %v236, %v279
    %v281 = vrot.slane %v280, 2
    %v282 = vadd.f32 %v280, %v281
    %v283 = vrot.slane %v282, 1
    %v284 = vadd.f32 %v282, %v283
    %v285 = vrot.slane %v249, 4
    %v286 = vadd.f32 %v249, %v285
    %v287 = vrot.slane %v286, 2
    %v288 = vadd.f32 %v286, %v287
    %v289 = vrot.slane %v288, 1
    %v290 = vadd.f32 %v288, %v289
    %v291 = vrot.slane %v262, 4
    %v292 = vadd.f32 %v262, %v291
    %v293 = vrot.slane %v292, 2
    %v294 = vadd.f32 %v292, %v293
    %v295 = vrot.slane %v294, 1
    %v296 = vadd.f32 %v294, %v295
    %v297 = vrcp.pop 8.0
    %v298 = vmul.f32 8.0, %v297
    %v299 = vsub.f32 1.0, %v298
    %v300 = vmul.f32 %v297, %v299
    %v301 = vadd.f32 %v297, %v300
    %vm302 = vweird.f32 %v297
    %v303 = vsel %vm302, %v297, %v301
    %v304 = vmul.f32 %v272, %v303
    %v305 = vmul.f32 %v278, %v303
    %v306 = vmul.f32 %v284, %v303
    %v307 = vmul.f32 %v290, %v303
    %v308 = vmul.f32 %v296, %v303
    %v309 = vsub.f32 %v210, %v304
    %v310 = vsub.f32 %v223, %v305
    %v311 = vsub.f32 %v236, %v306
    %v312 = vsub.f32 %v249, %v307
    %v313 = vsub.f32 %v262, %v308
    %v314 = vmul.f32 %v309, %v309
    %v315 = vmul.f32 %v310, %v310
    %v316 = vmul.f32 %v311, %v311
    %v317 = vmul.f32 %v312, %v312
    %v318 = vmul.f32 %v313, %v313
    %v319 = vrot.slane %v314, 4
    %v320 = vadd.f32 %v314, %v319
    %v321 = vrot.slane %v320, 2
    %v322 = vadd.f32 %v320, %v321
    %v323 = vrot.slane %v322, 1
    %v324 = vadd.f32 %v322, %v323
    %v325 = vrot.slane %v315, 4
    %v326 = vadd.f32 %v315, %v325
    %v327 = vrot.slane %v326, 2
    %v328 = vadd.f32 %v326, %v327
    %v329 = vrot.slane %v328, 1
    %v330 = vadd.f32 %v328, %v329
    %v331 = vrot.slane %v316, 4
    %v332 = vadd.f32 %v316, %v331
    %v333 = vrot.slane %v332, 2
    %v334 = vadd.f32 %v332, %v333
    %v335 = vrot.slane %v334, 1
    %v336 = vadd.f32 %v334, %v335
    %v337 = vrot.slane %v317, 4
    %v338 = vadd.f32 %v317, %v337
    %v339 = vrot.slane %v338, 2
    %v340 = vadd.f32 %v338, %v339
    %v341 = vrot.slane %v340, 1
    %v342 = vadd.f32 %v340, %v341
    %v343 = vrot.slane %v318, 4
    %v344 = vadd.f32 %v318, %v343
    %v345 = vrot.slane %v344, 2
    %v346 = vadd.f32 %v344, %v345
    %v347 = vrot.slane %v346, 1
    %v348 = vadd.f32 %v346, %v347
    %v349 = vmul.f32 %v324, %v303
    %v350 = vmul.f32 %v330, %v303
    %v351 = vmul.f32 %v336, %v303
    %v352 = vmul.f32 %v342, %v303
    %v353 = vmul.f32 %v348, %v303
    %v354 = vadd.f32 %v349, 1e-05
    %v355 = vadd.f32 %v350, 1e-05
    %v356 = vadd.f32 %v351, 1e-05
    %v357 = vadd.f32 %v352, 1e-05
    %v358 = vadd.f32 %v353, 1e-05
    %v359 = vrsqrt.pop %v354
    %v360 = vmul.f32 %v359, %v354
    %v361 = vmul.f32 %v360, %v359
    %v362 = vmul.f32 0.5, %v361
    %v363 = vsub.f32 1.5, %v362
    %v364 = vmul.f32 %v359, %v363
    %vm365 = vweird.f32 %v354
    %vm366 = vweird.f32 %v359
    %vm367 = vmor %vm365, %vm366
    %v368 = vsel %vm367, %v359, %v364
    %v369 = vrsqrt.pop %v355
    %v370 = vmul.f32 %v369, %v355
    %v371 = vmul.f32 %v370, %v369
    %v372 = vmul.f32 0.5, %v371
    %v373 = vsub.f32 1.5, %v372
    %v374 = vmul.f32 %v369, %v373
    %vm375 = vweird.f32 %v355
    %vm376 = vweird.f32 %v369
    %vm377 = vmor %vm375, %vm376
    %v378 = vsel %vm377, %v369, %v374
    %v379 = vrsqrt.pop %v356
    %v380 = vmul.f32 %v379, %v356
    %v381 = vmul.f32 %v380, %v379
    %v382 = vmul.f32 0.5, %v381
    %v383 = vsub.f32 1.5, %v382
    %v384 = vmul.f32 %v379, %v383
    %vm385 = vweird.f32 %v356
    %vm386 = vweird.f32 %v379
    %vm387 = vmor %vm385, %vm386
    %v388 = vsel %vm387, %v379, %v384
    %v389 = vrsqrt.pop %v357
    %v390 = vmul.f32 %v389, %v357
    %v391 = vmul.f32 %v390, %v389
    %v392 = vmul.f32 0.5, %v391
    %v393 = vsub.f32 1.5, %v392
    %v394 = vmul.f32 %v389, %v393
    %vm395 = vweird.f32 %v357
    %vm396 = vweird.f32 %v389
    %vm397 = vmor %vm395, %vm396
    %v398 = vsel %vm397, %v389, %v394
    %v399 = vrsqrt.pop %v358
    %v400 = vmul.f32 %v399, %v358
    %v401 = vmul.f32 %v400, %v399
    %v402 = vmul.f32 0.5, %v401
    %v403 = vsub.f32 1.5, %v402
    %v404 = vmul.f32 %v399, %v403
    %vm405 = vweird.f32 %v358
    %vm406 = vweird.f32 %v399
    %vm407 = vmor %vm405, %vm406
    %v408 = vsel %vm407, %v399, %v404
    %v411 = vperm.slane %v265, 0
    %v412 = vperm.slane %v265, 2
    %v413 = vperm.slane %v265, 4
    %v414 = vperm.slane %v265, 6
    %v415 = vperm.slane %v266, 0
    %v421 = vmul.f32 %v368, %v411
    %v422 = vmul.f32 %v378, %v412
    %v423 = vmul.f32 %v388, %v413
    %v424 = vmul.f32 %v398, %v414
    %v425 = vmul.f32 %v408, %v415
    %v426 = vperm.slane %v421, 0
    %v427 = vperm.slane %v422, 0
    %v428 = vperm.slane %v423, 0
    %v429 = vperm.slane %v424, 0
    %v430 = vperm.slane %v425, 0
    %v431 = vmul.f32 %v309, %v426
    %v432 = vmul.f32 %v310, %v427
    %v433 = vmul.f32 %v311, %v428
    %v434 = vmul.f32 %v312, %v429
    %v435 = vmul.f32 %v313, %v430
    %v436 = vperm.slane %v265, 1
    %v437 = vperm.slane %v265, 3
    %v438 = vperm.slane %v265, 5
    %v439 = vperm.slane %v265, 7
    %v440 = vperm.slane %v266, 1
    %v446 = vperm.slane %v436, 1
    %v447 = vperm.slane %v437, 1
    %v448 = vperm.slane %v438, 1
    %v449 = vperm.slane %v439, 1
    %v450 = vperm.slane %v440, 1
    %v451 = vadd.f32 %v431, %v446
    %v452 = vadd.f32 %v432, %v447
    %v453 = vadd.f32 %v433, %v448
    %v454 = vadd.f32 %v434, %v449
    %v455 = vadd.f32 %v435, %v450
    %v456 = vmax.f32 %v451, 0.0
    %v457 = vmax.f32 %v452, 0.0
    %v458 = vmax.f32 %v453, 0.0
    %v459 = vmax.f32 %v454, 0.0
    %v460 = vmax.f32 %v455, 0.0
    %v461 = vld [vmem:[#allocation13] sm:$0x3f]
    %v462 = vpack.c.bf16 %v456, %v456
    %v463 = vpack.c.bf16 %v457, %v457
    %v464 = vpack.c.bf16 %v458, %v458
    %v465 = vpack.c.bf16 %v459, %v459
    %v466 = vpack.c.bf16 %v460, %v460
    %v467 = vld [vmem:[#allocation10] sm:$0xff]
    %v468 = vld [vmem:[#allocation10 + $0x8] sm:$0xf]
    %v469 = vld [vmem:[#allocation10 + $0xc] sm:$0xff]
    %v470 = vld [vmem:[#allocation10 + $0x14] sm:$0xf]
    %v471 = vld [vmem:[#allocation10 + $0x18] sm:$0xff]
    %v472 = vld [vmem:[#allocation10 + $0x20] sm:$0xf]
    %v473 = vld [vmem:[#allocation10 + $0x24] sm:$0xff]
    %v474 = vld [vmem:[#allocation10 + $0x2c] sm:$0xf]
    %v475 = vld [vmem:[#allocation10 + $0x30] sm:$0xff]
    %v476 = vld [vmem:[#allocation10 + $0x38] sm:$0xf]
    %v477 = vld [vmem:[#allocation10 + $0x3c] sm:$0xff]
    %v478 = vld [vmem:[#allocation10 + $0x44] sm:$0xf]
    %v479 = vld [vmem:[#allocation10 + $0x48] sm:$0xff]
    %v480 = vld [vmem:[#allocation10 + $0x50] sm:$0xf]
    %v481 = vld [vmem:[#allocation10 + $0x54] sm:$0xff]
    %v482 = vld [vmem:[#allocation10 + $0x5c] sm:$0xf]
    %v483 = vld [vmem:[#allocation10 + $0x60] sm:$0xff]
    %v484 = vld [vmem:[#allocation10 + $0x68] sm:$0xf]
    %v485 = vld [vmem:[#allocation10 + $0x6c] sm:$0xff]
    %v486 = vld [vmem:[#allocation10 + $0x74] sm:$0xf]
    %v487 = vld [vmem:[#allocation10 + $0x78] sm:$0xff]
    %v488 = vld [vmem:[#allocation10 + $0x80] sm:$0xf]
    %v489 = vld [vmem:[#allocation10 + $0x84] sm:$0xff]
    %v490 = vld [vmem:[#allocation10 + $0x8c] sm:$0xf]
    %v491 = vld [vmem:[#allocation10 + $0x90] sm:$0xff]
    %v492 = vld [vmem:[#allocation10 + $0x98] sm:$0xf]
    %v493 = vld [vmem:[#allocation10 + $0x9c] sm:$0xff]
    %v494 = vld [vmem:[#allocation10 + $0xa4] sm:$0xf]
    %v495 = vld [vmem:[#allocation10 + $0xa8] sm:$0xff]
    %v496 = vld [vmem:[#allocation10 + $0xb0] sm:$0xf]
    %v497 = vld [vmem:[#allocation10 + $0xb4] sm:$0xff]
    %v498 = vld [vmem:[#allocation10 + $0xbc] sm:$0xf]
    %v499 = vld [vmem:[#allocation10 + $0xc0] sm:$0xff]
    %v500 = vld [vmem:[#allocation10 + $0xc8] sm:$0xf]
    %v501 = vld [vmem:[#allocation10 + $0xcc] sm:$0xff]
    %v502 = vld [vmem:[#allocation10 + $0xd4] sm:$0xf]
    %v503 = vld [vmem:[#allocation10 + $0xd8] sm:$0xff]
    %v504 = vld [vmem:[#allocation10 + $0xe0] sm:$0xf]
    %v505 = vld [vmem:[#allocation10 + $0xe4] sm:$0xff]
    %v506 = vld [vmem:[#allocation10 + $0xec] sm:$0xf]
    %v507 = vld [vmem:[#allocation10 + $0xf0] sm:$0xff]
    %v508 = vld [vmem:[#allocation10 + $0xf8] sm:$0xf]
    %v509 = vld [vmem:[#allocation10 + $0xfc] sm:$0xff]
    %v510 = vld [vmem:[#allocation10 + $0x104] sm:$0xf]
    %v511 = vld [vmem:[#allocation10 + $0x108] sm:$0xff]
    %v512 = vld [vmem:[#allocation10 + $0x110] sm:$0xf]
    %v513 = vld [vmem:[#allocation10 + $0x114] sm:$0xff]
    %v514 = vld [vmem:[#allocation10 + $0x11c] sm:$0xf]
    %v515 = vld [vmem:[#allocation10 + $0x120] sm:$0xff]
    %v516 = vld [vmem:[#allocation10 + $0x128] sm:$0xf]
    %v517 = vld [vmem:[#allocation10 + $0x12c] sm:$0xff]
    %v518 = vld [vmem:[#allocation10 + $0x134] sm:$0xf]
    %v519 = vld [vmem:[#allocation10 + $0x138] sm:$0xff]
    %v520 = vld [vmem:[#allocation10 + $0x140] sm:$0xf]
    %v521 = vld [vmem:[#allocation10 + $0x144] sm:$0xff]
    %v522 = vld [vmem:[#allocation10 + $0x14c] sm:$0xf]
    %v523 = vld [vmem:[#allocation10 + $0x150] sm:$0xff]
    %v524 = vld [vmem:[#allocation10 + $0x158] sm:$0xf]
    %v525 = vld [vmem:[#allocation10 + $0x15c] sm:$0xff]
    %v526 = vld [vmem:[#allocation10 + $0x164] sm:$0xf]
    %v527 = vld [vmem:[#allocation10 + $0x168] sm:$0xff]
    %v528 = vld [vmem:[#allocation10 + $0x170] sm:$0xf]
    %v529 = vld [vmem:[#allocation10 + $0x174] sm:$0xff]
    %v530 = vld [vmem:[#allocation10 + $0x17c] sm:$0xf]
    %v531 = vld [vmem:[#allocation10 + $0x180] sm:$0xff]
    %v532 = vld [vmem:[#allocation10 + $0x188] sm:$0xf]
    %v533 = vld [vmem:[#allocation10 + $0x18c] sm:$0xff]
    %v534 = vld [vmem:[#allocation10 + $0x194] sm:$0xf]
    %v535 = vld [vmem:[#allocation10 + $0x198] sm:$0xff]
    %v536 = vld [vmem:[#allocation10 + $0x1a0] sm:$0xf]
    %v537 = vld [vmem:[#allocation10 + $0x1a4] sm:$0xff]
    %v538 = vld [vmem:[#allocation10 + $0x1ac] sm:$0xf]
    %v539 = vld [vmem:[#allocation10 + $0x1b0] sm:$0xff]
    %v540 = vld [vmem:[#allocation10 + $0x1b8] sm:$0xf]
    %v541 = vld [vmem:[#allocation10 + $0x1bc] sm:$0xff]
    %v542 = vld [vmem:[#allocation10 + $0x1c4] sm:$0xf]
    %v543 = vld [vmem:[#allocation10 + $0x1c8] sm:$0xff]
    %v544 = vld [vmem:[#allocation10 + $0x1d0] sm:$0xf]
    %v545 = vld [vmem:[#allocation10 + $0x1d4] sm:$0xff]
    %v546 = vld [vmem:[#allocation10 + $0x1dc] sm:$0xf]
    %v547 = vld [vmem:[#allocation10 + $0x1e0] sm:$0xff]
    %v548 = vld [vmem:[#allocation10 + $0x1e8] sm:$0xf]
    %v549 = vld [vmem:[#allocation10 + $0x1ec] sm:$0xff]
    %v550 = vld [vmem:[#allocation10 + $0x1f4] sm:$0xf]
    %v551 = vld [vmem:[#allocation10 + $0x1f8] sm:$0xff]
    %v552 = vld [vmem:[#allocation10 + $0x200] sm:$0xf]
    %v553 = vld [vmem:[#allocation10 + $0x204] sm:$0xff]
    %v554 = vld [vmem:[#allocation10 + $0x20c] sm:$0xf]
    %v555 = vld [vmem:[#allocation10 + $0x210] sm:$0xff]
    %v556 = vld [vmem:[#allocation10 + $0x218] sm:$0xf]
    %v557 = vld [vmem:[#allocation10 + $0x21c] sm:$0xff]
    %v558 = vld [vmem:[#allocation10 + $0x224] sm:$0xf]
    %v559 = vld [vmem:[#allocation10 + $0x228] sm:$0xff]
    %v560 = vld [vmem:[#allocation10 + $0x230] sm:$0xf]
    %v561 = vld [vmem:[#allocation10 + $0x234] sm:$0xff]
    %v562 = vld [vmem:[#allocation10 + $0x23c] sm:$0xf]
    %v563 = vld [vmem:[#allocation10 + $0x240] sm:$0xff]
    %v564 = vld [vmem:[#allocation10 + $0x248] sm:$0xf]
    %v565 = vld [vmem:[#allocation10 + $0x24c] sm:$0xff]
    %v566 = vld [vmem:[#allocation10 + $0x254] sm:$0xf]
    %v567 = vld [vmem:[#allocation10 + $0x258] sm:$0xff]
    %v568 = vld [vmem:[#allocation10 + $0x260] sm:$0xf]
    %v569 = vld [vmem:[#allocation10 + $0x264] sm:$0xff]
    %v570 = vld [vmem:[#allocation10 + $0x26c] sm:$0xf]
    %v571 = vld [vmem:[#allocation10 + $0x270] sm:$0xff]
    %v572 = vld [vmem:[#allocation10 + $0x278] sm:$0xf]
    %v573 = vld [vmem:[#allocation10 + $0x27c] sm:$0xff]
    %v574 = vld [vmem:[#allocation10 + $0x284] sm:$0xf]
    %v575 = vld [vmem:[#allocation10 + $0x288] sm:$0xff]
    %v576 = vld [vmem:[#allocation10 + $0x290] sm:$0xf]
    %v577 = vld [vmem:[#allocation10 + $0x294] sm:$0xff]
    %v578 = vld [vmem:[#allocation10 + $0x29c] sm:$0xf]
    %v579 = vld [vmem:[#allocation10 + $0x2a0] sm:$0xff]
    %v580 = vld [vmem:[#allocation10 + $0x2a8] sm:$0xf]
    %v581 = vld [vmem:[#allocation10 + $0x2ac] sm:$0xff]
    %v582 = vld [vmem:[#allocation10 + $0x2b4] sm:$0xf]
    %v583 = vld [vmem:[#allocation10 + $0x2b8] sm:$0xff]
    %v584 = vld [vmem:[#allocation10 + $0x2c0] sm:$0xf]
    %v585 = vld [vmem:[#allocation10 + $0x2c4] sm:$0xff]
    %v586 = vld [vmem:[#allocation10 + $0x2cc] sm:$0xf]
    %v587 = vld [vmem:[#allocation10 + $0x2d0] sm:$0xff]
    %v588 = vld [vmem:[#allocation10 + $0x2d8] sm:$0xf]
    %v589 = vld [vmem:[#allocation10 + $0x2dc] sm:$0xff]
    %v590 = vld [vmem:[#allocation10 + $0x2e4] sm:$0xf]
    %v591 = vld [vmem:[#allocation10 + $0x2e8] sm:$0xff]
    %v592 = vld [vmem:[#allocation10 + $0x2f0] sm:$0xf]
    %v593 = vld [vmem:[#allocation10 + $0x2f4] sm:$0xff]
    %v594 = vld [vmem:[#allocation10 + $0x2fc] sm:$0xf]
    %v595 = vld [vmem:[#allocation10 + $0x300] sm:$0xff]
    %v596 = vld [vmem:[#allocation10 + $0x308] sm:$0xf]
    %v597 = vld [vmem:[#allocation10 + $0x30c] sm:$0xff]
    %v598 = vld [vmem:[#allocation10 + $0x314] sm:$0xf]
    %v599 = vld [vmem:[#allocation10 + $0x318] sm:$0xff]
    %v600 = vld [vmem:[#allocation10 + $0x320] sm:$0xf]
    %v601 = vld [vmem:[#allocation10 + $0x324] sm:$0xff]
    %v602 = vld [vmem:[#allocation10 + $0x32c] sm:$0xf]
    %v603 = vld [vmem:[#allocation10 + $0x330] sm:$0xff]
    %v604 = vld [vmem:[#allocation10 + $0x338] sm:$0xf]
    %v605 = vld [vmem:[#allocation10 + $0x33c] sm:$0xff]
    %v606 = vld [vmem:[#allocation10 + $0x344] sm:$0xf]
    %v607 = vld [vmem:[#allocation10 + $0x348] sm:$0xff]
    %v608 = vld [vmem:[#allocation10 + $0x350] sm:$0xf]
    %v609 = vld [vmem:[#allocation10 + $0x354] sm:$0xff]
    %v610 = vld [vmem:[#allocation10 + $0x35c] sm:$0xf]
    %v611 = vld [vmem:[#allocation10 + $0x360] sm:$0xff]
    %v612 = vld [vmem:[#allocation10 + $0x368] sm:$0xf]
    %v613 = vld [vmem:[#allocation10 + $0x36c] sm:$0xff]
    %v614 = vld [vmem:[#allocation10 + $0x374] sm:$0xf]
    %v615 = vld [vmem:[#allocation10 + $0x378] sm:$0xff]
    %v616 = vld [vmem:[#allocation10 + $0x380] sm:$0xf]
    %v617 = vld [vmem:[#allocation10 + $0x384] sm:$0xff]
    %v618 = vld [vmem:[#allocation10 + $0x38c] sm:$0xf]
    %v619 = vld [vmem:[#allocation10 + $0x390] sm:$0xff]
    %v620 = vld [vmem:[#allocation10 + $0x398] sm:$0xf]
    %v621 = vld [vmem:[#allocation10 + $0x39c] sm:$0xff]
    %v622 = vld [vmem:[#allocation10 + $0x3a4] sm:$0xf]
    %v623 = vld [vmem:[#allocation10 + $0x3a8] sm:$0xff]
    %v624 = vld [vmem:[#allocation10 + $0x3b0] sm:$0xf]
    %v625 = vld [vmem:[#allocation10 + $0x3b4] sm:$0xff]
    %v626 = vld [vmem:[#allocation10 + $0x3bc] sm:$0xf]
    %v627 = vld [vmem:[#allocation5] sm:$0xff]
    %v628 = vpack.c.bf16 %v627, %v627
    %v629 = vld [vmem:[#allocation11] sm:$0xff]
    %v630 = vld [vmem:[#allocation11 + $0x8] sm:$0xf]
    %v633 = vunpack.c.l.b16 %v629
    %v634 = vunpack.c.h.b16 %v629
    %v635 = vunpack.c.l.b16 %v630
    %v636 = vpack.c.b16 %v633, %v633
    %v637 = vpack.c.b16 %v634, %v634
    %v638 = vpack.c.b16 %v635, %v635
    %vm639 = vcmask 64512
    %v641 = vsel %vm639, %v628, 0
    %vm643 = vcmask 1043456
    %v645 = vsel %vm643, %v636, 0
    %v648 = vsel %vm643, %v637, 0
    %v651 = vsel %vm643, %v638, 0
    %653 = vmatpush.bf16.msra.mxu0 0
    %654 = vmatpush.bf16.msra.mxu0 0
    %655 = vmatpush.bf16.msra.mxu0 0
    %656 = vmatpush.bf16.msra.mxu0 0
    %657 = vmatpush.bf16.msra.mxu0 0
    %658 = vmatpush.bf16.msra.mxu0 0
    %659 = vmatpush.bf16.msra.mxu0 0
    %660 = vmatpush.bf16.msra.mxu0 %v645
    %661 = vmatmul.bf16.gmra.mxu0 %v641
    %v662 = vpop.f32.mrf.mxu0
    %v663 = vadd.f32 0.0, %v662
    %v664 = vpop.f32.mrf.mxu0
    %665 = vdwg.mxu0
    %666 = vmatpush.bf16.msra.mxu0 0
    %667 = vmatpush.bf16.msra.mxu0 0
    %668 = vmatpush.bf16.msra.mxu0 0
    %669 = vmatpush.bf16.msra.mxu0 0
    %670 = vmatpush.bf16.msra.mxu0 0
    %671 = vmatpush.bf16.msra.mxu0 0
    %672 = vmatpush.bf16.msra.mxu0 0
    %673 = vmatpush.bf16.msra.mxu0 %v648
    %674 = vmatmul.bf16.gmra.mxu0 %v641
    %v675 = vpop.f32.mrf.mxu0
    %v676 = vadd.f32 0.0, %v675
    %v677 = vpop.f32.mrf.mxu0
    %678 = vdwg.mxu0
    %679 = vmatpush.bf16.msra.mxu0 0
    %680 = vmatpush.bf16.msra.mxu0 0
    %681 = vmatpush.bf16.msra.mxu0 0
    %682 = vmatpush.bf16.msra.mxu0 0
    %683 = vmatpush.bf16.msra.mxu0 0
    %684 = vmatpush.bf16.msra.mxu0 0
    %685 = vmatpush.bf16.msra.mxu0 0
    %686 = vmatpush.bf16.msra.mxu0 %v651
    %687 = vmatmul.bf16.gmra.mxu0 %v641
    %v688 = vpop.f32.mrf.mxu0
    %v689 = vadd.f32 0.0, %v688
    %v690 = vpop.f32.mrf.mxu0
    %691 = vdwg.mxu0
    %v852 = vunpack.c.l.b16 %v467
    %v853 = vunpack.c.h.b16 %v467
    %v854 = vunpack.c.l.b16 %v468
    %v855 = vunpack.c.l.b16 %v469
    %v856 = vunpack.c.h.b16 %v469
    %v857 = vunpack.c.l.b16 %v470
    %v858 = vunpack.c.l.b16 %v471
    %v859 = vunpack.c.h.b16 %v471
    %v860 = vunpack.c.l.b16 %v472
    %v861 = vunpack.c.l.b16 %v473
    %v862 = vunpack.c.h.b16 %v473
    %v863 = vunpack.c.l.b16 %v474
    %v864 = vunpack.c.l.b16 %v475
    %v865 = vunpack.c.h.b16 %v475
    %v866 = vunpack.c.l.b16 %v476
    %v867 = vunpack.c.l.b16 %v477
    %v868 = vunpack.c.h.b16 %v477
    %v869 = vunpack.c.l.b16 %v478
    %v870 = vunpack.c.l.b16 %v479
    %v871 = vunpack.c.h.b16 %v479
    %v872 = vunpack.c.l.b16 %v480
    %v873 = vunpack.c.l.b16 %v481
    %v874 = vunpack.c.h.b16 %v481
    %v875 = vunpack.c.l.b16 %v482
    %v876 = vunpack.c.l.b16 %v483
    %v877 = vunpack.c.h.b16 %v483
    %v878 = vunpack.c.l.b16 %v484
    %v879 = vunpack.c.l.b16 %v485
    %v880 = vunpack.c.h.b16 %v485
    %v881 = vunpack.c.l.b16 %v486
    %v882 = vunpack.c.l.b16 %v487
    %v883 = vunpack.c.h.b16 %v487
    %v884 = vunpack.c.l.b16 %v488
    %v885 = vunpack.c.l.b16 %v489
    %v886 = vunpack.c.h.b16 %v489
    %v887 = vunpack.c.l.b16 %v490
    %v888 = vunpack.c.l.b16 %v491
    %v889 = vunpack.c.h.b16 %v491
    %v890 = vunpack.c.l.b16 %v492
    %v891 = vunpack.c.l.b16 %v493
    %v892 = vunpack.c.h.b16 %v493
    %v893 = vunpack.c.l.b16 %v494
    %v894 = vunpack.c.l.b16 %v495
    %v895 = vunpack.c.h.b16 %v495
    %v896 = vunpack.c.l.b16 %v496
    %v897 = vunpack.c.l.b16 %v497
    %v898 = vunpack.c.h.b16 %v497
    %v899 = vunpack.c.l.b16 %v498
    %v900 = vunpack.c.l.b16 %v499
    %v901 = vunpack.c.h.b16 %v499
    %v902 = vunpack.c.l.b16 %v500
    %v903 = vunpack.c.l.b16 %v501
    %v904 = vunpack.c.h.b16 %v501
    %v905 = vunpack.c.l.b16 %v502
    %v906 = vunpack.c.l.b16 %v503
    %v907 = vunpack.c.h.b16 %v503
    %v908 = vunpack.c.l.b16 %v504
    %v909 = vunpack.c.l.b16 %v505
    %v910 = vunpack.c.h.b16 %v505
    %v911 = vunpack.c.l.b16 %v506
    %v912 = vunpack.c.l.b16 %v507
    %v913 = vunpack.c.h.b16 %v507
    %v914 = vunpack.c.l.b16 %v508
    %v915 = vunpack.c.l.b16 %v509
    %v916 = vunpack.c.h.b16 %v509
    %v917 = vunpack.c.l.b16 %v510
    %v918 = vunpack.c.l.b16 %v511
    %v919 = vunpack.c.h.b16 %v511
    %v920 = vunpack.c.l.b16 %v512
    %v921 = vunpack.c.l.b16 %v513
    %v922 = vunpack.c.h.b16 %v513
    %v923 = vunpack.c.l.b16 %v514
    %v924 = vunpack.c.l.b16 %v515
    %v925 = vunpack.c.h.b16 %v515
    %v926 = vunpack.c.l.b16 %v516
    %v927 = vunpack.c.l.b16 %v517
    %v928 = vunpack.c.h.b16 %v517
    %v929 = vunpack.c.l.b16 %v518
    %v930 = vunpack.c.l.b16 %v519
    %v931 = vunpack.c.h.b16 %v519
    %v932 = vunpack.c.l.b16 %v520
    %v933 = vunpack.c.l.b16 %v521
    %v934 = vunpack.c.h.b16 %v521
    %v935 = vunpack.c.l.b16 %v522
    %v936 = vunpack.c.l.b16 %v523
    %v937 = vunpack.c.h.b16 %v523
    %v938 = vunpack.c.l.b16 %v524
    %v939 = vunpack.c.l.b16 %v525
    %v940 = vunpack.c.h.b16 %v525
    %v941 = vunpack.c.l.b16 %v526
    %v942 = vunpack.c.l.b16 %v527
    %v943 = vunpack.c.h.b16 %v527
    %v944 = vunpack.c.l.b16 %v528
    %v945 = vunpack.c.l.b16 %v529
    %v946 = vunpack.c.h.b16 %v529
    %v947 = vunpack.c.l.b16 %v530
    %v948 = vunpack.c.l.b16 %v531
    %v949 = vunpack.c.h.b16 %v531
    %v950 = vunpack.c.l.b16 %v532
    %v951 = vunpack.c.l.b16 %v533
    %v952 = vunpack.c.h.b16 %v533
    %v953 = vunpack.c.l.b16 %v534
    %v954 = vunpack.c.l.b16 %v535
    %v955 = vunpack.c.h.b16 %v535
    %v956 = vunpack.c.l.b16 %v536
    %v957 = vunpack.c.l.b16 %v537
    %v958 = vunpack.c.h.b16 %v537
    %v959 = vunpack.c.l.b16 %v538
    %v960 = vunpack.c.l.b16 %v539
    %v961 = vunpack.c.h.b16 %v539
    %v962 = vunpack.c.l.b16 %v540
    %v963 = vunpack.c.l.b16 %v541
    %v964 = vunpack.c.h.b16 %v541
    %v965 = vunpack.c.l.b16 %v542
    %v966 = vunpack.c.l.b16 %v543
    %v967 = vunpack.c.h.b16 %v543
    %v968 = vunpack.c.l.b16 %v544
    %v969 = vunpack.c.l.b16 %v545
    %v970 = vunpack.c.h.b16 %v545
    %v971 = vunpack.c.l.b16 %v546
    %v972 = vunpack.c.l.b16 %v547
    %v973 = vunpack.c.h.b16 %v547
    %v974 = vunpack.c.l.b16 %v548
    %v975 = vunpack.c.l.b16 %v549
    %v976 = vunpack.c.h.b16 %v549
    %v977 = vunpack.c.l.b16 %v550
    %v978 = vunpack.c.l.b16 %v551
    %v979 = vunpack.c.h.b16 %v551
    %v980 = vunpack.c.l.b16 %v552
    %v981 = vunpack.c.l.b16 %v553
    %v982 = vunpack.c.h.b16 %v553
    %v983 = vunpack.c.l.b16 %v554
    %v984 = vunpack.c.l.b16 %v555
    %v985 = vunpack.c.h.b16 %v555
    %v986 = vunpack.c.l.b16 %v556
    %v987 = vunpack.c.l.b16 %v557
    %v988 = vunpack.c.h.b16 %v557
    %v989 = vunpack.c.l.b16 %v558
    %v990 = vunpack.c.l.b16 %v559
    %v991 = vunpack.c.h.b16 %v559
    %v992 = vunpack.c.l.b16 %v560
    %v993 = vunpack.c.l.b16 %v561
    %v994 = vunpack.c.h.b16 %v561
    %v995 = vunpack.c.l.b16 %v562
    %v996 = vunpack.c.l.b16 %v563
    %v997 = vunpack.c.h.b16 %v563
    %v998 = vunpack.c.l.b16 %v564
    %v999 = vunpack.c.l.b16 %v565
    %v1000 = vunpack.c.h.b16 %v565
    %v1001 = vunpack.c.l.b16 %v566
    %v1002 = vunpack.c.l.b16 %v567
    %v1003 = vunpack.c.h.b16 %v567
    %v1004 = vunpack.c.l.b16 %v568
    %v1005 = vunpack.c.l.b16 %v569
    %v1006 = vunpack.c.h.b16 %v569
    %v1007 = vunpack.c.l.b16 %v570
    %v1008 = vunpack.c.l.b16 %v571
    %v1009 = vunpack.c.h.b16 %v571
    %v1010 = vunpack.c.l.b16 %v572
    %v1011 = vunpack.c.l.b16 %v573
    %v1012 = vunpack.c.h.b16 %v573
    %v1013 = vunpack.c.l.b16 %v574
    %v1014 = vunpack.c.l.b16 %v575
    %v1015 = vunpack.c.h.b16 %v575
    %v1016 = vunpack.c.l.b16 %v576
    %v1017 = vunpack.c.l.b16 %v577
    %v1018 = vunpack.c.h.b16 %v577
    %v1019 = vunpack.c.l.b16 %v578
    %v1020 = vunpack.c.l.b16 %v579
    %v1021 = vunpack.c.h.b16 %v579
    %v1022 = vunpack.c.l.b16 %v580
    %v1023 = vunpack.c.l.b16 %v581
    %v1024 = vunpack.c.h.b16 %v581
    %v1025 = vunpack.c.l.b16 %v582
    %v1026 = vunpack.c.l.b16 %v583
    %v1027 = vunpack.c.h.b16 %v583
    %v1028 = vunpack.c.l.b16 %v584
    %v1029 = vunpack.c.l.b16 %v585
    %v1030 = vunpack.c.h.b16 %v585
    %v1031 = vunpack.c.l.b16 %v586
    %v1032 = vunpack.c.l.b16 %v587
    %v1033 = vunpack.c.h.b16 %v587
    %v1034 = vunpack.c.l.b16 %v588
    %v1035 = vunpack.c.l.b16 %v589
    %v1036 = vunpack.c.h.b16 %v589
    %v1037 = vunpack.c.l.b16 %v590
    %v1038 = vunpack.c.l.b16 %v591
    %v1039 = vunpack.c.h.b16 %v591
    %v1040 = vunpack.c.l.b16 %v592
    %v1041 = vunpack.c.l.b16 %v593
    %v1042 = vunpack.c.h.b16 %v593
    %v1043 = vunpack.c.l.b16 %v594
    %v1044 = vunpack.c.l.b16 %v595
    %v1045 = vunpack.c.h.b16 %v595
    %v1046 = vunpack.c.l.b16 %v596
    %v1047 = vunpack.c.l.b16 %v597
    %v1048 = vunpack.c.h.b16 %v597
    %v1049 = vunpack.c.l.b16 %v598
    %v1050 = vunpack.c.l.b16 %v599
    %v1051 = vunpack.c.h.b16 %v599
    %v1052 = vunpack.c.l.b16 %v600
    %v1053 = vunpack.c.l.b16 %v601
    %v1054 = vunpack.c.h.b16 %v601
    %v1055 = vunpack.c.l.b16 %v602
    %v1056 = vunpack.c.l.b16 %v603
    %v1057 = vunpack.c.h.b16 %v603
    %v1058 = vunpack.c.l.b16 %v604
    %v1059 = vunpack.c.l.b16 %v605
    %v1060 = vunpack.c.h.b16 %v605
    %v1061 = vunpack.c.l.b16 %v606
    %v1062 = vunpack.c.l.b16 %v607
    %v1063 = vunpack.c.h.b16 %v607
    %v1064 = vunpack.c.l.b16 %v608
    %v1065 = vunpack.c.l.b16 %v609
    %v1066 = vunpack.c.h.b16 %v609
    %v1067 = vunpack.c.l.b16 %v610
    %v1068 = vunpack.c.l.b16 %v611
    %v1069 = vunpack.c.h.b16 %v611
    %v1070 = vunpack.c.l.b16 %v612
    %v1071 = vunpack.c.l.b16 %v613
    %v1072 = vunpack.c.h.b16 %v613
    %v1073 = vunpack.c.l.b16 %v614
    %v1074 = vunpack.c.l.b16 %v615
    %v1075 = vunpack.c.h.b16 %v615
    %v1076 = vunpack.c.l.b16 %v616
    %v1077 = vunpack.c.l.b16 %v617
    %v1078 = vunpack.c.h.b16 %v617
    %v1079 = vunpack.c.l.b16 %v618
    %v1080 = vunpack.c.l.b16 %v619
    %v1081 = vunpack.c.h.b16 %v619
    %v1082 = vunpack.c.l.b16 %v620
    %v1083 = vunpack.c.l.b16 %v621
    %v1084 = vunpack.c.h.b16 %v621
    %v1085 = vunpack.c.l.b16 %v622
    %v1086 = vunpack.c.l.b16 %v623
    %v1087 = vunpack.c.h.b16 %v623
    %v1088 = vunpack.c.l.b16 %v624
    %v1089 = vunpack.c.l.b16 %v625
    %v1090 = vunpack.c.h.b16 %v625
    %v1091 = vunpack.c.l.b16 %v626
    %v1092 = vpack.c.b16 %v855, %v852
    %v1093 = vpack.c.b16 %v856, %v853
    %v1094 = vpack.c.b16 %v857, %v854
    %v1095 = vpack.c.b16 %v861, %v858
    %v1096 = vpack.c.b16 %v862, %v859
    %v1097 = vpack.c.b16 %v863, %v860
    %v1098 = vpack.c.b16 %v867, %v864
    %v1099 = vpack.c.b16 %v868, %v865
    %v1100 = vpack.c.b16 %v869, %v866
    %v1101 = vpack.c.b16 %v873, %v870
    %v1102 = vpack.c.b16 %v874, %v871
    %v1103 = vpack.c.b16 %v875, %v872
    %v1104 = vpack.c.b16 %v879, %v876
    %v1105 = vpack.c.b16 %v880, %v877
    %v1106 = vpack.c.b16 %v881, %v878
    %v1107 = vpack.c.b16 %v885, %v882
    %v1108 = vpack.c.b16 %v886, %v883
    %v1109 = vpack.c.b16 %v887, %v884
    %v1110 = vpack.c.b16 %v891, %v888
    %v1111 = vpack.c.b16 %v892, %v889
    %v1112 = vpack.c.b16 %v893, %v890
    %v1113 = vpack.c.b16 %v897, %v894
    %v1114 = vpack.c.b16 %v898, %v895
    %v1115 = vpack.c.b16 %v899, %v896
    %v1116 = vpack.c.b16 %v903, %v900
    %v1117 = vpack.c.b16 %v904, %v901
    %v1118 = vpack.c.b16 %v905, %v902
    %v1119 = vpack.c.b16 %v909, %v906
    %v1120 = vpack.c.b16 %v910, %v907
    %v1121 = vpack.c.b16 %v911, %v908
    %v1122 = vpack.c.b16 %v915, %v912
    %v1123 = vpack.c.b16 %v916, %v913
    %v1124 = vpack.c.b16 %v917, %v914
    %v1125 = vpack.c.b16 %v921, %v918
    %v1126 = vpack.c.b16 %v922, %v919
    %v1127 = vpack.c.b16 %v923, %v920
    %v1128 = vpack.c.b16 %v927, %v924
    %v1129 = vpack.c.b16 %v928, %v925
    %v1130 = vpack.c.b16 %v929, %v926
    %v1131 = vpack.c.b16 %v933, %v930
    %v1132 = vpack.c.b16 %v934, %v931
    %v1133 = vpack.c.b16 %v935, %v932
    %v1134 = vpack.c.b16 %v939, %v936
    %v1135 = vpack.c.b16 %v940, %v937
    %v1136 = vpack.c.b16 %v941, %v938
    %v1137 = vpack.c.b16 %v945, %v942
    %v1138 = vpack.c.b16 %v946, %v943
    %v1139 = vpack.c.b16 %v947, %v944
    %v1140 = vpack.c.b16 %v951, %v948
    %v1141 = vpack.c.b16 %v952, %v949
    %v1142 = vpack.c.b16 %v953, %v950
    %v1143 = vpack.c.b16 %v957, %v954
    %v1144 = vpack.c.b16 %v958, %v955
    %v1145 = vpack.c.b16 %v959, %v956
    %v1146 = vpack.c.b16 %v963, %v960
    %v1147 = vpack.c.b16 %v964, %v961
    %v1148 = vpack.c.b16 %v965, %v962
    %v1149 = vpack.c.b16 %v969, %v966
    %v1150 = vpack.c.b16 %v970, %v967
    %v1151 = vpack.c.b16 %v971, %v968
    %v1152 = vpack.c.b16 %v975, %v972
    %v1153 = vpack.c.b16 %v976, %v973
    %v1154 = vpack.c.b16 %v977, %v974
    %v1155 = vpack.c.b16 %v981, %v978
    %v1156 = vpack.c.b16 %v982, %v979
    %v1157 = vpack.c.b16 %v983, %v980
    %v1158 = vpack.c.b16 %v987, %v984
    %v1159 = vpack.c.b16 %v988, %v985
    %v1160 = vpack.c.b16 %v989, %v986
    %v1161 = vpack.c.b16 %v993, %v990
    %v1162 = vpack.c.b16 %v994, %v991
    %v1163 = vpack.c.b16 %v995, %v992
    %v1164 = vpack.c.b16 %v999, %v996
    %v1165 = vpack.c.b16 %v1000, %v997
    %v1166 = vpack.c.b16 %v1001, %v998
    %v1167 = vpack.c.b16 %v1005, %v1002
    %v1168 = vpack.c.b16 %v1006, %v1003
    %v1169 = vpack.c.b16 %v1007, %v1004
    %v1170 = vpack.c.b16 %v1011, %v1008
    %v1171 = vpack.c.b16 %v1012, %v1009
    %v1172 = vpack.c.b16 %v1013, %v1010
    %v1173 = vpack.c.b16 %v1017, %v1014
    %v1174 = vpack.c.b16 %v1018, %v1015
    %v1175 = vpack.c.b16 %v1019, %v1016
    %v1176 = vpack.c.b16 %v1023, %v1020
    %v1177 = vpack.c.b16 %v1024, %v1021
    %v1178 = vpack.c.b16 %v1025, %v1022
    %v1179 = vpack.c.b16 %v1029, %v1026
    %v1180 = vpack.c.b16 %v1030, %v1027
    %v1181 = vpack.c.b16 %v1031, %v1028
    %v1182 = vpack.c.b16 %v1035, %v1032
    %v1183 = vpack.c.b16 %v1036, %v1033
    %v1184 = vpack.c.b16 %v1037, %v1034
    %v1185 = vpack.c.b16 %v1041, %v1038
    %v1186 = vpack.c.b16 %v1042, %v1039
    %v1187 = vpack.c.b16 %v1043, %v1040
    %v1188 = vpack.c.b16 %v1047, %v1044
    %v1189 = vpack.c.b16 %v1048, %v1045
    %v1190 = vpack.c.b16 %v1049, %v1046
    %v1191 = vpack.c.b16 %v1053, %v1050
    %v1192 = vpack.c.b16 %v1054, %v1051
    %v1193 = vpack.c.b16 %v1055, %v1052
    %v1194 = vpack.c.b16 %v1059, %v1056
    %v1195 = vpack.c.b16 %v1060, %v1057
    %v1196 = vpack.c.b16 %v1061, %v1058
    %v1197 = vpack.c.b16 %v1065, %v1062
    %v1198 = vpack.c.b16 %v1066, %v1063
    %v1199 = vpack.c.b16 %v1067, %v1064
    %v1200 = vpack.c.b16 %v1071, %v1068
    %v1201 = vpack.c.b16 %v1072, %v1069
    %v1202 = vpack.c.b16 %v1073, %v1070
    %v1203 = vpack.c.b16 %v1077, %v1074
    %v1204 = vpack.c.b16 %v1078, %v1075
    %v1205 = vpack.c.b16 %v1079, %v1076
    %v1206 = vpack.c.b16 %v1083, %v1080
    %v1207 = vpack.c.b16 %v1084, %v1081
    %v1208 = vpack.c.b16 %v1085, %v1082
    %v1209 = vpack.c.b16 %v1089, %v1086
    %v1210 = vpack.c.b16 %v1090, %v1087
    %v1211 = vpack.c.b16 %v1091, %v1088
    %1332 = vmatpush.bf16.msra.mxu0 %v1113
    %1333 = vmatpush.bf16.msra.mxu0 %v1110
    %1334 = vmatpush.bf16.msra.mxu0 %v1107
    %1335 = vmatpush.bf16.msra.mxu0 %v1104
    %1336 = vmatpush.bf16.msra.mxu0 %v1101
    %1337 = vmatpush.bf16.msra.mxu0 %v1098
    %1338 = vmatpush.bf16.msra.mxu0 %v1095
    %1339 = vmatpush.bf16.msra.mxu0 %v1092
    %1340 = vmatmul.bf16.gmra.mxu0 %v462
    %v1341 = vpop.f32.mrf.mxu0
    %v1342 = vadd.f32 %v663, %v1341
    %v1343 = vpop.f32.mrf.mxu0
    %1344 = vdwg.mxu0
    %1345 = vmatpush.bf16.msra.mxu0 %v1137
    %1346 = vmatpush.bf16.msra.mxu0 %v1134
    %1347 = vmatpush.bf16.msra.mxu0 %v1131
    %1348 = vmatpush.bf16.msra.mxu0 %v1128
    %1349 = vmatpush.bf16.msra.mxu0 %v1125
    %1350 = vmatpush.bf16.msra.mxu0 %v1122
    %1351 = vmatpush.bf16.msra.mxu0 %v1119
    %1352 = vmatpush.bf16.msra.mxu0 %v1116
    %1353 = vmatmul.bf16.gmra.mxu0 %v463
    %v1354 = vpop.f32.mrf.mxu0
    %v1355 = vadd.f32 %v1342, %v1354
    %v1356 = vpop.f32.mrf.mxu0
    %1357 = vdwg.mxu0
    %1358 = vmatpush.bf16.msra.mxu0 %v1161
    %1359 = vmatpush.bf16.msra.mxu0 %v1158
    %1360 = vmatpush.bf16.msra.mxu0 %v1155
    %1361 = vmatpush.bf16.msra.mxu0 %v1152
    %1362 = vmatpush.bf16.msra.mxu0 %v1149
    %1363 = vmatpush.bf16.msra.mxu0 %v1146
    %1364 = vmatpush.bf16.msra.mxu0 %v1143
    %1365 = vmatpush.bf16.msra.mxu0 %v1140
    %1366 = vmatmul.bf16.gmra.mxu0 %v464
    %v1367 = vpop.f32.mrf.mxu0
    %v1368 = vadd.f32 %v1355, %v1367
    %v1369 = vpop.f32.mrf.mxu0
    %1370 = vdwg.mxu0
    %1371 = vmatpush.bf16.msra.mxu0 %v1185
    %1372 = vmatpush.bf16.msra.mxu0 %v1182
    %1373 = vmatpush.bf16.msra.mxu0 %v1179
    %1374 = vmatpush.bf16.msra.mxu0 %v1176
    %1375 = vmatpush.bf16.msra.mxu0 %v1173
    %1376 = vmatpush.bf16.msra.mxu0 %v1170
    %1377 = vmatpush.bf16.msra.mxu0 %v1167
    %1378 = vmatpush.bf16.msra.mxu0 %v1164
    %1379 = vmatmul.bf16.gmra.mxu0 %v465
    %v1380 = vpop.f32.mrf.mxu0
    %v1381 = vadd.f32 %v1368, %v1380
    %v1382 = vpop.f32.mrf.mxu0
    %1383 = vdwg.mxu0
    %1384 = vmatpush.bf16.msra.mxu0 %v1209
    %1385 = vmatpush.bf16.msra.mxu0 %v1206
    %1386 = vmatpush.bf16.msra.mxu0 %v1203
    %1387 = vmatpush.bf16.msra.mxu0 %v1200
    %1388 = vmatpush.bf16.msra.mxu0 %v1197
    %1389 = vmatpush.bf16.msra.mxu0 %v1194
    %1390 = vmatpush.bf16.msra.mxu0 %v1191
    %1391 = vmatpush.bf16.msra.mxu0 %v1188
    %1392 = vmatmul.bf16.gmra.mxu0 %v466
    %v1393 = vpop.f32.mrf.mxu0
    %v1394 = vadd.f32 %v1381, %v1393
    %v1395 = vpop.f32.mrf.mxu0
    %1396 = vdwg.mxu0
    %1397 = vmatpush.bf16.msra.mxu0 %v1114
    %1398 = vmatpush.bf16.msra.mxu0 %v1111
    %1399 = vmatpush.bf16.msra.mxu0 %v1108
    %1400 = vmatpush.bf16.msra.mxu0 %v1105
    %1401 = vmatpush.bf16.msra.mxu0 %v1102
    %1402 = vmatpush.bf16.msra.mxu0 %v1099
    %1403 = vmatpush.bf16.msra.mxu0 %v1096
    %1404 = vmatpush.bf16.msra.mxu0 %v1093
    %1405 = vmatmul.bf16.gmra.mxu0 %v462
    %v1406 = vpop.f32.mrf.mxu0
    %v1407 = vadd.f32 %v676, %v1406
    %v1408 = vpop.f32.mrf.mxu0
    %1409 = vdwg.mxu0
    %1410 = vmatpush.bf16.msra.mxu0 %v1138
    %1411 = vmatpush.bf16.msra.mxu0 %v1135
    %1412 = vmatpush.bf16.msra.mxu0 %v1132
    %1413 = vmatpush.bf16.msra.mxu0 %v1129
    %1414 = vmatpush.bf16.msra.mxu0 %v1126
    %1415 = vmatpush.bf16.msra.mxu0 %v1123
    %1416 = vmatpush.bf16.msra.mxu0 %v1120
    %1417 = vmatpush.bf16.msra.mxu0 %v1117
    %1418 = vmatmul.bf16.gmra.mxu0 %v463
    %v1419 = vpop.f32.mrf.mxu0
    %v1420 = vadd.f32 %v1407, %v1419
    %v1421 = vpop.f32.mrf.mxu0
    %1422 = vdwg.mxu0
    %1423 = vmatpush.bf16.msra.mxu0 %v1162
    %1424 = vmatpush.bf16.msra.mxu0 %v1159
    %1425 = vmatpush.bf16.msra.mxu0 %v1156
    %1426 = vmatpush.bf16.msra.mxu0 %v1153
    %1427 = vmatpush.bf16.msra.mxu0 %v1150
    %1428 = vmatpush.bf16.msra.mxu0 %v1147
    %1429 = vmatpush.bf16.msra.mxu0 %v1144
    %1430 = vmatpush.bf16.msra.mxu0 %v1141
    %1431 = vmatmul.bf16.gmra.mxu0 %v464
    %v1432 = vpop.f32.mrf.mxu0
    %v1433 = vadd.f32 %v1420, %v1432
    %v1434 = vpop.f32.mrf.mxu0
    %1435 = vdwg.mxu0
    %1436 = vmatpush.bf16.msra.mxu0 %v1186
    %1437 = vmatpush.bf16.msra.mxu0 %v1183
    %1438 = vmatpush.bf16.msra.mxu0 %v1180
    %1439 = vmatpush.bf16.msra.mxu0 %v1177
    %1440 = vmatpush.bf16.msra.mxu0 %v1174
    %1441 = vmatpush.bf16.msra.mxu0 %v1171
    %1442 = vmatpush.bf16.msra.mxu0 %v1168
    %1443 = vmatpush.bf16.msra.mxu0 %v1165
    %1444 = vmatmul.bf16.gmra.mxu0 %v465
    %v1445 = vpop.f32.mrf.mxu0
    %v1446 = vadd.f32 %v1433, %v1445
    %v1447 = vpop.f32.mrf.mxu0
    %1448 = vdwg.mxu0
    %1449 = vmatpush.bf16.msra.mxu0 %v1210
    %1450 = vmatpush.bf16.msra.mxu0 %v1207
    %1451 = vmatpush.bf16.msra.mxu0 %v1204
    %1452 = vmatpush.bf16.msra.mxu0 %v1201
    %1453 = vmatpush.bf16.msra.mxu0 %v1198
    %1454 = vmatpush.bf16.msra.mxu0 %v1195
    %1455 = vmatpush.bf16.msra.mxu0 %v1192
    %1456 = vmatpush.bf16.msra.mxu0 %v1189
    %1457 = vmatmul.bf16.gmra.mxu0 %v466
    %v1458 = vpop.f32.mrf.mxu0
    %v1459 = vadd.f32 %v1446, %v1458
    %v1460 = vpop.f32.mrf.mxu0
    %1461 = vdwg.mxu0
    %1462 = vmatpush.bf16.msra.mxu0 %v1115
    %1463 = vmatpush.bf16.msra.mxu0 %v1112
    %1464 = vmatpush.bf16.msra.mxu0 %v1109
    %1465 = vmatpush.bf16.msra.mxu0 %v1106
    %1466 = vmatpush.bf16.msra.mxu0 %v1103
    %1467 = vmatpush.bf16.msra.mxu0 %v1100
    %1468 = vmatpush.bf16.msra.mxu0 %v1097
    %1469 = vmatpush.bf16.msra.mxu0 %v1094
    %1470 = vmatmul.bf16.gmra.mxu0 %v462
    %v1471 = vpop.f32.mrf.mxu0
    %v1472 = vadd.f32 %v689, %v1471
    %v1473 = vpop.f32.mrf.mxu0
    %1474 = vdwg.mxu0
    %1475 = vmatpush.bf16.msra.mxu0 %v1139
    %1476 = vmatpush.bf16.msra.mxu0 %v1136
    %1477 = vmatpush.bf16.msra.mxu0 %v1133
    %1478 = vmatpush.bf16.msra.mxu0 %v1130
    %1479 = vmatpush.bf16.msra.mxu0 %v1127
    %1480 = vmatpush.bf16.msra.mxu0 %v1124
    %1481 = vmatpush.bf16.msra.mxu0 %v1121
    %1482 = vmatpush.bf16.msra.mxu0 %v1118
    %1483 = vmatmul.bf16.gmra.mxu0 %v463
    %v1484 = vpop.f32.mrf.mxu0
    %v1485 = vadd.f32 %v1472, %v1484
    %v1486 = vpop.f32.mrf.mxu0
    %1487 = vdwg.mxu0
    %1488 = vmatpush.bf16.msra.mxu0 %v1163
    %1489 = vmatpush.bf16.msra.mxu0 %v1160
    %1490 = vmatpush.bf16.msra.mxu0 %v1157
    %1491 = vmatpush.bf16.msra.mxu0 %v1154
    %1492 = vmatpush.bf16.msra.mxu0 %v1151
    %1493 = vmatpush.bf16.msra.mxu0 %v1148
    %1494 = vmatpush.bf16.msra.mxu0 %v1145
    %1495 = vmatpush.bf16.msra.mxu0 %v1142
    %1496 = vmatmul.bf16.gmra.mxu0 %v464
    %v1497 = vpop.f32.mrf.mxu0
    %v1498 = vadd.f32 %v1485, %v1497
    %v1499 = vpop.f32.mrf.mxu0
    %1500 = vdwg.mxu0
    %1501 = vmatpush.bf16.msra.mxu0 %v1187
    %1502 = vmatpush.bf16.msra.mxu0 %v1184
    %1503 = vmatpush.bf16.msra.mxu0 %v1181
    %1504 = vmatpush.bf16.msra.mxu0 %v1178
    %1505 = vmatpush.bf16.msra.mxu0 %v1175
    %1506 = vmatpush.bf16.msra.mxu0 %v1172
    %1507 = vmatpush.bf16.msra.mxu0 %v1169
    %1508 = vmatpush.bf16.msra.mxu0 %v1166
    %1509 = vmatmul.bf16.gmra.mxu0 %v465
    %v1510 = vpop.f32.mrf.mxu0
    %v1511 = vadd.f32 %v1498, %v1510
    %v1512 = vpop.f32.mrf.mxu0
    %1513 = vdwg.mxu0
    %1514 = vmatpush.bf16.msra.mxu0 %v1211
    %1515 = vmatpush.bf16.msra.mxu0 %v1208
    %1516 = vmatpush.bf16.msra.mxu0 %v1205
    %1517 = vmatpush.bf16.msra.mxu0 %v1202
    %1518 = vmatpush.bf16.msra.mxu0 %v1199
    %1519 = vmatpush.bf16.msra.mxu0 %v1196
    %1520 = vmatpush.bf16.msra.mxu0 %v1193
    %1521 = vmatpush.bf16.msra.mxu0 %v1190
    %1522 = vmatmul.bf16.gmra.mxu0 %v466
    %v1523 = vpop.f32.mrf.mxu0
    %v1524 = vadd.f32 %v1511, %v1523
    %v1525 = vpop.f32.mrf.mxu0
    %1526 = vdwg.mxu0
    %v1528 = vperm.slane %v461, 0
    %v1529 = vperm.slane %v461, 2
    %v1530 = vperm.slane %v461, 4
    %v1534 = vperm.slane %v1528, 0
    %v1535 = vperm.slane %v1529, 0
    %v1536 = vperm.slane %v1530, 0
    %v1537 = vadd.f32 %v1394, %v1534
    %v1538 = vadd.f32 %v1459, %v1535
    %v1539 = vadd.f32 %v1524, %v1536
    %v1540 = vmax.f32 %v1537, 0.0
    %v1541 = vmax.f32 %v1538, 0.0
    %v1542 = vmax.f32 %v1539, 0.0
    %v1543 = vperm.slane %v461, 1
    %v1544 = vperm.slane %v461, 3
    %v1545 = vperm.slane %v461, 5
    %v1549 = vperm.slane %v1543, 1
    %v1550 = vperm.slane %v1544, 1
    %v1551 = vperm.slane %v1545, 1
    %v1552 = vmul.f32 %v1540, %v1549
    %v1553 = vmul.f32 %v1541, %v1550
    %v1554 = vmul.f32 %v1542, %v1551
    %v1555 = vadd.f32 %v1552, %v1553
    %v1556 = vadd.f32 %v1555, %v1554
    %1557 = vadd.xlane.f32.xlu0 %v1556
    %v1558 = vpop.xlane.xlu0 %1557
    %s1559 = sld [smem:[#allocation2]]
    %v1560 = vstv %s1559
    %v1561 = vadd.f32 %v1558, %v1560
    %vm1562 = vcmask 7168
    %1563 = vst.msk [vmem:[%s8] sm:$0xff] %vm1562, %v1561
    // Predicated region
    $region62: #{critic_forward_small.1} parent=1 // pred_check
      _
    $region63: #{critic_forward_small.1} parent=1 // pred_check_branch
      %1565 = sbr.rel (0) target = $region65
    $region64: #{critic_forward_small.1} parent=1 // pred_region
      _
    $region65: #{critic_forward_small.1} parent=1 // pred_fallthru
      _
    // Predicated region
    $region66: #{critic_forward_small.1} parent=1 // pred_check
      _
    $region67: #{critic_forward_small.1} parent=1 // pred_check_branch
      %1567 = sbr.rel (0) target = $region69
    $region68: #{critic_forward_small.1} parent=1 // pred_region
      _
    $region69: #{critic_forward_small.1} parent=1 // pred_fallthru
      _
    %1568 = vsyncpa [#allocation4], 1
    %1569 = vsyncpa [#allocation6], 1
    %1570 = vsyncpa [#allocation9], 1
    %1571 = vsyncpa [#allocation12], 1

</llo_original>
